<compile_context>
chip_gen: v6e
topology: v6e:2x2x1
jax: 0.10.0
libtpu: 0.0.40
codegen_flags: <defaults>
</compile_context>

<pallas_src>
import functools

import jax
import jax.numpy as jnp
from jax.experimental import pallas as pl
from jax.experimental.pallas import tpu as pltpu


# ----------------------------------------------------------------------------
# Tiling helpers (generation-aware).
# ----------------------------------------------------------------------------
def _pick_tile(dim, cap, align=128):
    """Largest tile <= cap that divides `dim` and is a multiple of `align`
    (or the full dim, if the dim itself already fits under the cap).
    Raises instead of silently returning a block that exceeds the budget."""
    if dim <= cap:
        return dim
    t = (cap // align) * align
    while t >= align:
        if dim % t == 0:
            return t
        t -= align
    raise ValueError(
        f"No {align}-aligned tile <= {cap} evenly divides dim={dim}; "
        "pad the feature dimension to a multiple of 128."
    )


def _tile_plan(n, k):
    """Return (tn, tk, vmem_limit_bytes) for the current TPU generation."""
    try:
        vmem_cap = int(pltpu.get_tpu_info().vmem_capacity_bytes)
    except Exception:
        vmem_cap = 64 * 1024 * 1024  # conservative (v7x-like) default
    if vmem_cap >= 100 * 1024 * 1024:
        # v5e / v6e: 128 MiB VMEM, 1 TensorCore.  Full-N weight tiles ->
        # each (tk, N) tile is a single contiguous HBM region.
        tn_cap, tk_cap = n, 2048
        vmem_limit = 96 * 1024 * 1024
    else:
        # v7x: 64 MiB VMEM, 2 TensorCores.  Keep weight tiles small and the
        # parallel N-tile count even so both cores stream weight DMAs.
        tn_cap = max(128, min(4096, n // 2)) if n >= 256 else n
        tk_cap = 2048
        vmem_limit = 48 * 1024 * 1024
    return _pick_tile(n, tn_cap), _pick_tile(k, tk_cap), vmem_limit


# ----------------------------------------------------------------------------
# Fused (int8-weight matmul + dequant scale + bias + activation) kernel.
# Grid = (N_tiles, K_tiles); K (reduction) is the trailing "arbitrary" axis.
# ----------------------------------------------------------------------------
def _linear_act_kernel(x_ref, w_ref, scale_ref, b_ref, o_ref, acc_ref, *,
                       activation, tk):
    k = pl.program_id(1)

    @pl.when(k == 0)
    def _():
        acc_ref[...] = jnp.zeros_like(acc_ref)

    # x is resident ([M, K] in VMEM); slice out the current K chunk.
    k0 = pl.multiple_of(k * tk, tk)
    x_blk = x_ref[:, pl.ds(k0, tk)]
    # int8 -> bf16 is exact (|q| <= 127); the per-column scale is applied once
    # in the epilogue, so this is a plain convert (minimal VPU work).
    w_blk = w_ref[...].astype(jnp.bfloat16)
    acc_ref[...] += jnp.dot(x_blk, w_blk, preferred_element_type=jnp.float32)

    @pl.when(k == pl.num_programs(1) - 1)
    def _():
        y = acc_ref[...] * scale_ref[...] + b_ref[...]
        if activation == "relu":
            y = jnp.maximum(y, 0.0)
        elif activation == "sigmoid":
            y = jax.nn.sigmoid(y)
        o_ref[...] = y.astype(o_ref.dtype)


def linear_act(x, w_q, w_scale, b, *, activation, out_dtype):
    """activation(x @ (w_q * w_scale) + b) as a tiled Pallas TPU kernel.

    x: [M, K] bf16, w_q: [K, N] int8, w_scale: [1, N] f32 (per out channel),
    b: [N] f32.  Accumulation in f32.
    """
    M, K = x.shape
    Kw, N = w_q.shape
    assert K == Kw and w_scale.shape == (1, N) and b.shape == (N,)

    tn, tk, vmem_limit = _tile_plan(N, K)
    kernel = functools.partial(_linear_act_kernel, activation=activation, tk=tk)

    cost = pl.CostEstimate(
        flops=2 * M * K * N,
        transcendentals=(M * N) if activation == "sigmoid" else 0,
        bytes_accessed=int(x.size) * x.dtype.itemsize      # resident activations
        + int(w_q.size)                                     # int8 weights (dominant)
        + 2 * 4 * N                                         # scale + bias
        + M * N * jnp.dtype(out_dtype).itemsize,            # output
    )

    return pl.pallas_call(
        kernel,
        out_shape=jax.ShapeDtypeStruct((M, N), out_dtype),
        grid_spec=pltpu.PrefetchScalarGridSpec(
            num_scalar_prefetch=0,
            grid=(N // tn, K // tk),                         # N parallel, K reduce
            in_specs=[
                pl.BlockSpec((M, K), lambda j, k: (0, 0)),    # x: fully resident
                pl.BlockSpec((tk, tn), lambda j, k: (k, j)),  # streamed int8 W
                pl.BlockSpec((1, tn), lambda j, k: (0, j)),   # per-column scale
                pl.BlockSpec((1, tn), lambda j, k: (0, j)),   # bias
            ],
            out_specs=pl.BlockSpec((M, tn), lambda j, k: (0, j)),
            scratch_shapes=[pltpu.VMEM((M, tn), jnp.float32)],
        ),
        compiler_params=pltpu.CompilerParams(
            dimension_semantics=("parallel", "arbitrary"),
            vmem_limit_bytes=vmem_limit,
        ),
        cost_estimate=cost,
    )(x, w_q, w_scale, b.reshape(1, N))


# ----------------------------------------------------------------------------
# Parameters (torch.nn.Linear-style init, then int8 per-channel quantization).
# ----------------------------------------------------------------------------
def quantize_weight(w_f32):
    """Symmetric per-output-channel int8 quantization: w ~= w_q * scale."""
    absmax = jnp.max(jnp.abs(w_f32), axis=0, keepdims=True)          # [1, N]
    scale = jnp.maximum(absmax, 1e-30) / 127.0
    w_q = jnp.clip(jnp.round(w_f32 / scale), -127.0, 127.0).astype(jnp.int8)
    return w_q, scale.astype(jnp.float32)


def make_frames_params(key, s):
    d_in, d_hid, d_out = 9 * s * s, 2 * s * s, s * s
    k1, k2, k3, k4 = jax.random.split(key, 4)
    lim1 = 1.0 / (d_in ** 0.5)
    lim2 = 1.0 / (d_hid ** 0.5)
    w1 = jax.random.uniform(k1, (d_in, d_hid), jnp.float32, -lim1, lim1)
    b1 = jax.random.uniform(k2, (d_hid,), jnp.float32, -lim1, lim1)
    w2 = jax.random.uniform(k3, (d_hid, d_out), jnp.float32, -lim2, lim2)
    b2 = jax.random.uniform(k4, (d_out,), jnp.float32, -lim2, lim2)
    w1_q, s1 = quantize_weight(w1)
    w2_q, s2 = quantize_weight(w2)
    return dict(w1_q=w1_q, s1=s1, b1=b1, w2_q=w2_q, s2=s2, b2=b2,
                w1_f32=w1, w2_f32=w2)


# ----------------------------------------------------------------------------
# Frames forward pass (glue in plain JAX, hot path in Pallas).
# ----------------------------------------------------------------------------
@jax.jit
def frames_forward(x, w1_q, s1, b1, w2_q, s2, b2):
    # nn.Flatten(): [B, 9, S, S] -> [B, 9*S*S] (row-major, matches torch).
    B = x.shape[0]
    x_flat = x.reshape(B, -1).astype(jnp.bfloat16)
    h = linear_act(x_flat, w1_q, s1, b1, activation="relu",
                   out_dtype=jnp.bfloat16)
    y = linear_act(h, w2_q, s2, b2, activation="sigmoid",
                   out_dtype=jnp.float32)
    return y


if __name__ == "__main__":
    # Small shapes consistent with the module structure (real module: S = 64).
    S = 16
    D_OUT = S * S

    key = jax.random.PRNGKey(0)
    k_params, k_x = jax.random.split(key)

    x = jax.random.normal(k_x, (2, 9, S, S), jnp.float32)
    p = make_frames_params(k_params, S)

    out = frames_forward(x, p["w1_q"], p["s1"], p["b1"],
                         p["w2_q"], p["s2"], p["b2"])
    jax.block_until_ready(out)

    assert out.shape == (2, D_OUT)
    assert out.dtype == jnp.float32
    # Sigmoid output must lie in [0, 1].
    assert bool(jnp.all((out >= 0.0) & (out <= 1.0)))

    # (1) Exact-semantics reference: same int8 weights, bf16 inputs, f32 acc.
    xb = x.reshape(2, -1).astype(jnp.bfloat16)
    h_ref = jnp.maximum(
        jnp.dot(xb, p["w1_q"].astype(jnp.bfloat16),
                preferred_element_type=jnp.float32) * p["s1"] + p["b1"], 0.0
    ).astype(jnp.bfloat16)
    y_ref = jax.nn.sigmoid(
        jnp.dot(h_ref, p["w2_q"].astype(jnp.bfloat16),
                preferred_element_type=jnp.float32) * p["s2"] + p["b2"])
    assert bool(jnp.allclose(out, y_ref, atol=5e-3, rtol=5e-3))

    # (2) Quantization-fidelity check against the unquantized f32 reference.
    xf = x.reshape(2, -1)
    h_f = jnp.maximum(xf @ p["w1_f32"] + p["b1"], 0.0)
    y_f = jax.nn.sigmoid(h_f @ p["w2_f32"] + p["b2"])
    assert bool(jnp.allclose(out, y_f, atol=3e-2, rtol=3e-2))

    print("KERNEL_OK")
</pallas_src>

<mosaic_0001>
module attributes {stable_mosaic.version = 11 : i64} {
  func.func @_linear_act_kernel(%arg0: i32, %arg1: i32, %arg2: memref<2x512xbf16, #tpu.memory_space<vmem>>, %arg3: memref<512x128xi8, #tpu.memory_space<vmem>>, %arg4: memref<1x128xf32, #tpu.memory_space<vmem>>, %arg5: memref<1x128xf32, #tpu.memory_space<vmem>>, %arg6: memref<2x128xf32, #tpu.memory_space<vmem>>, %arg7: memref<2x128xf32, #tpu.memory_space<vmem>>) attributes {dimension_semantics = [#tpu.dimension_semantics<parallel>, #tpu.dimension_semantics<arbitrary>], iteration_bounds = array<i64: 2, 1>, scalar_prefetch = 0 : i64, scratch_operands = 1 : i64, tpu.core_type = #tpu.core_type<tc>, window_params = [{pipeline_mode = #tpu.pipeline_mode<synchronous>, transform_indices = @transform_0, window_bounds = array<i64: 2, 512>}, {transform_indices = @transform_1, window_bounds = array<i64: 512, 128>}, {transform_indices = @transform_2, window_bounds = array<i64: 1, 128>}, {transform_indices = @transform_3, window_bounds = array<i64: 1, 128>}, {transform_indices = @transform_4, window_bounds = array<i64: 2, 128>}]} {
    %c0_i32 = arith.constant 0 : i32
    %0 = arith.cmpi eq, %arg1, %c0_i32 : i32
    %1 = arith.extui %0 : i1 to i32
    %c0_i32_0 = arith.constant 0 : i32
    %2 = arith.cmpi ne, %1, %c0_i32_0 : i32
    scf.if %2 {
      %cst_9 = arith.constant 0.000000e+00 : f32
      %16 = vector.broadcast %cst_9 : f32 to vector<2x128xf32>
      %c0_10 = arith.constant 0 : index
      %c0_11 = arith.constant 0 : index
      %17 = vector.load %arg7[%c0_10, %c0_11] : memref<2x128xf32, #tpu.memory_space<vmem>>, vector<2x128xf32>
      tpu.vector_store %arg7[%c0_10, %c0_11], %16 {strides = array<i32>} : memref<2x128xf32, #tpu.memory_space<vmem>>, vector<2x128xf32>,
    } else {
    }
    %c512_i32 = arith.constant 512 : i32
    %3 = arith.muli %arg1, %c512_i32 : i32
    %4 = tpu.assume_multiple %3, 512 : i32
    %c0 = arith.constant 0 : index
    %5 = arith.index_cast %4 : i32 to index
    %6 = vector.load %arg2[%c0, %5] : memref<2x512xbf16, #tpu.memory_space<vmem>>, vector<2x512xbf16>
    %c0_1 = arith.constant 0 : index
    %c0_2 = arith.constant 0 : index
    %7 = vector.load %arg3[%c0_1, %c0_2] : memref<512x128xi8, #tpu.memory_space<vmem>>, vector<512x128xi8>
    %8 = arith.sitofp %7 : vector<512x128xi8> to vector<512x128xbf16>
    %c0_3 = arith.constant 0 : index
    %c0_4 = arith.constant 0 : index
    %9 = vector.load %arg7[%c0_3, %c0_4] : memref<2x128xf32, #tpu.memory_space<vmem>>, vector<2x128xf32>
    %cst = arith.constant dense<0.000000e+00> : vector<2x128xf32>
    %10 = tpu.matmul %6, %8, %cst {dimension_numbers = #tpu.dot_dimension_numbers<[1], [0], [0], [1], [0, 0, 1, 1], [], []>} : vector<2x512xbf16>, vector<512x128xbf16>, vector<2x128xf32> -> vector<2x128xf32>
    %11 = arith.addf %9, %10 : vector<2x128xf32>
    %c0_5 = arith.constant 0 : index
    %c0_6 = arith.constant 0 : index
    %12 = vector.load %arg7[%c0_5, %c0_6] : memref<2x128xf32, #tpu.memory_space<vmem>>, vector<2x128xf32>
    tpu.vector_store %arg7[%c0_5, %c0_6], %11 {strides = array<i32>} : memref<2x128xf32, #tpu.memory_space<vmem>>, vector<2x128xf32>,
    %c0_i32_7 = arith.constant 0 : i32
    %13 = arith.cmpi eq, %arg1, %c0_i32_7 : i32
    %14 = arith.extui %13 : i1 to i32
    %c0_i32_8 = arith.constant 0 : i32
    %15 = arith.cmpi ne, %14, %c0_i32_8 : i32
    scf.if %15 {
      %c0_9 = arith.constant 0 : index
      %c0_10 = arith.constant 0 : index
      %16 = vector.load %arg7[%c0_9, %c0_10] : memref<2x128xf32, #tpu.memory_space<vmem>>, vector<2x128xf32>
      %c0_11 = arith.constant 0 : index
      %c0_12 = arith.constant 0 : index
      %17 = vector.load %arg4[%c0_11, %c0_12] : memref<1x128xf32, #tpu.memory_space<vmem>>, vector<1x128xf32>
      %18 = vector.broadcast %17 : vector<1x128xf32> to vector<2x128xf32>
      %19 = arith.mulf %16, %18 : vector<2x128xf32>
      %c0_13 = arith.constant 0 : index
      %c0_14 = arith.constant 0 : index
      %20 = vector.load %arg5[%c0_13, %c0_14] : memref<1x128xf32, #tpu.memory_space<vmem>>, vector<1x128xf32>
      %21 = vector.broadcast %20 : vector<1x128xf32> to vector<2x128xf32>
      %22 = arith.addf %19, %21 : vector<2x128xf32>
      %23 = arith.negf %22 : vector<2x128xf32>
      %24 = math.exp %23 : vector<2x128xf32>
      %cst_15 = arith.constant 1.000000e+00 : f32
      %25 = vector.broadcast %cst_15 : f32 to vector<2x128xf32>
      %26 = arith.addf %25, %24 : vector<2x128xf32>
      %27 = arith.divf %25, %26 : vector<2x128xf32>
      %c0_16 = arith.constant 0 : index
      %c0_17 = arith.constant 0 : index
      %28 = vector.load %arg6[%c0_16, %c0_17] : memref<2x128xf32, #tpu.memory_space<vmem>>, vector<2x128xf32>
      tpu.vector_store %arg6[%c0_16, %c0_17], %27 {strides = array<i32>} : memref<2x128xf32, #tpu.memory_space<vmem>>, vector<2x128xf32>,
    } else {
    }
    return
  }
  func.func @transform_0(%arg0: i32, %arg1: i32) -> (i32, i32) {
    %c0_i32 = arith.constant 0 : i32
    %c0_i32_0 = arith.constant 0 : i32
    %c0_i32_1 = arith.constant 0 : i32
    return %c0_i32, %c0_i32_0 : i32, i32
  }
  func.func @transform_1(%arg0: i32, %arg1: i32) -> (i32, i32) {
    %c0_i32 = arith.constant 0 : i32
    return %arg1, %arg0 : i32, i32
  }
  func.func @transform_2(%arg0: i32, %arg1: i32) -> (i32, i32) {
    %c0_i32 = arith.constant 0 : i32
    %c0_i32_0 = arith.constant 0 : i32
    return %c0_i32, %arg0 : i32, i32
  }
  func.func @transform_3(%arg0: i32, %arg1: i32) -> (i32, i32) {
    %c0_i32 = arith.constant 0 : i32
    %c0_i32_0 = arith.constant 0 : i32
    return %c0_i32, %arg0 : i32, i32
  }
  func.func @transform_4(%arg0: i32, %arg1: i32) -> (i32, i32) {
    %c0_i32 = arith.constant 0 : i32
    %c0_i32_0 = arith.constant 0 : i32
    return %c0_i32, %arg0 : i32, i32
  }
}

module attributes {stable_mosaic.version = 11 : i64} {
  func.func @_linear_act_kernel(%arg0: i32, %arg1: i32, %arg2: memref<2x2304xbf16, #tpu.memory_space<vmem>>, %arg3: memref<1152x256xi8, #tpu.memory_space<vmem>>, %arg4: memref<1x256xf32, #tpu.memory_space<vmem>>, %arg5: memref<1x256xf32, #tpu.memory_space<vmem>>, %arg6: memref<2x256xbf16, #tpu.memory_space<vmem>>, %arg7: memref<2x256xf32, #tpu.memory_space<vmem>>) attributes {dimension_semantics = [#tpu.dimension_semantics<parallel>, #tpu.dimension_semantics<arbitrary>], iteration_bounds = array<i64: 2, 2>, scalar_prefetch = 0 : i64, scratch_operands = 1 : i64, tpu.core_type = #tpu.core_type<tc>, window_params = [{pipeline_mode = #tpu.pipeline_mode<synchronous>, transform_indices = @transform_0, window_bounds = array<i64: 2, 2304>}, {transform_indices = @transform_1, window_bounds = array<i64: 1152, 256>}, {transform_indices = @transform_2, window_bounds = array<i64: 1, 256>}, {transform_indices = @transform_3, window_bounds = array<i64: 1, 256>}, {transform_indices = @transform_4, window_bounds = array<i64: 2, 256>}]} {
    %c0_i32 = arith.constant 0 : i32
    %0 = arith.cmpi eq, %arg1, %c0_i32 : i32
    %1 = arith.extui %0 : i1 to i32
    %c0_i32_0 = arith.constant 0 : i32
    %2 = arith.cmpi ne, %1, %c0_i32_0 : i32
    scf.if %2 {
      %cst_8 = arith.constant 0.000000e+00 : f32
      %16 = vector.broadcast %cst_8 : f32 to vector<2x256xf32>
      %c0_9 = arith.constant 0 : index
      %c0_10 = arith.constant 0 : index
      %17 = vector.load %arg7[%c0_9, %c0_10] : memref<2x256xf32, #tpu.memory_space<vmem>>, vector<2x256xf32>
      tpu.vector_store %arg7[%c0_9, %c0_10], %16 {strides = array<i32>} : memref<2x256xf32, #tpu.memory_space<vmem>>, vector<2x256xf32>,
    } else {
    }
    %c1152_i32 = arith.constant 1152 : i32
    %3 = arith.muli %arg1, %c1152_i32 : i32
    %4 = tpu.assume_multiple %3, 1152 : i32
    %c0 = arith.constant 0 : index
    %5 = arith.index_cast %4 : i32 to index
    %6 = vector.load %arg2[%c0, %5] : memref<2x2304xbf16, #tpu.memory_space<vmem>>, vector<2x1152xbf16>
    %c0_1 = arith.constant 0 : index
    %c0_2 = arith.constant 0 : index
    %7 = vector.load %arg3[%c0_1, %c0_2] : memref<1152x256xi8, #tpu.memory_space<vmem>>, vector<1152x256xi8>
    %8 = arith.sitofp %7 : vector<1152x256xi8> to vector<1152x256xbf16>
    %c0_3 = arith.constant 0 : index
    %c0_4 = arith.constant 0 : index
    %9 = vector.load %arg7[%c0_3, %c0_4] : memref<2x256xf32, #tpu.memory_space<vmem>>, vector<2x256xf32>
    %cst = arith.constant dense<0.000000e+00> : vector<2x256xf32>
    %10 = tpu.matmul %6, %8, %cst {dimension_numbers = #tpu.dot_dimension_numbers<[1], [0], [0], [1], [0, 0, 1, 1], [], []>} : vector<2x1152xbf16>, vector<1152x256xbf16>, vector<2x256xf32> -> vector<2x256xf32>
    %11 = arith.addf %9, %10 : vector<2x256xf32>
    %c0_5 = arith.constant 0 : index
    %c0_6 = arith.constant 0 : index
    %12 = vector.load %arg7[%c0_5, %c0_6] : memref<2x256xf32, #tpu.memory_space<vmem>>, vector<2x256xf32>
    tpu.vector_store %arg7[%c0_5, %c0_6], %11 {strides = array<i32>} : memref<2x256xf32, #tpu.memory_space<vmem>>, vector<2x256xf32>,
    %c1_i32 = arith.constant 1 : i32
    %13 = arith.cmpi eq, %arg1, %c1_i32 : i32
    %14 = arith.extui %13 : i1 to i32
    %c0_i32_7 = arith.constant 0 : i32
    %15 = arith.cmpi ne, %14, %c0_i32_7 : i32
    scf.if %15 {
      %c0_8 = arith.constant 0 : index
      %c0_9 = arith.constant 0 : index
      %16 = vector.load %arg7[%c0_8, %c0_9] : memref<2x256xf32, #tpu.memory_space<vmem>>, vector<2x256xf32>
      %c0_10 = arith.constant 0 : index
      %c0_11 = arith.constant 0 : index
      %17 = vector.load %arg4[%c0_10, %c0_11] : memref<1x256xf32, #tpu.memory_space<vmem>>, vector<1x256xf32>
      %18 = vector.broadcast %17 : vector<1x256xf32> to vector<2x256xf32>
      %19 = arith.mulf %16, %18 : vector<2x256xf32>
      %c0_12 = arith.constant 0 : index
      %c0_13 = arith.constant 0 : index
      %20 = vector.load %arg5[%c0_12, %c0_13] : memref<1x256xf32, #tpu.memory_space<vmem>>, vector<1x256xf32>
      %21 = vector.broadcast %20 : vector<1x256xf32> to vector<2x256xf32>
      %22 = arith.addf %19, %21 : vector<2x256xf32>
      %cst_14 = arith.constant 0.000000e+00 : f32
      %23 = vector.broadcast %cst_14 : f32 to vector<2x256xf32>
      %24 = arith.maximumf %22, %23 : vector<2x256xf32>
      %25 = arith.truncf %24 : vector<2x256xf32> to vector<2x256xbf16>
      %c0_15 = arith.constant 0 : index
      %c0_16 = arith.constant 0 : index
      %26 = vector.load %arg6[%c0_15, %c0_16] : memref<2x256xbf16, #tpu.memory_space<vmem>>, vector<2x256xbf16>
      tpu.vector_store %arg6[%c0_15, %c0_16], %25 {strides = array<i32>} : memref<2x256xbf16, #tpu.memory_space<vmem>>, vector<2x256xbf16>,
    } else {
    }
    return
  }
  func.func @transform_0(%arg0: i32, %arg1: i32) -> (i32, i32) {
    %c0_i32 = arith.constant 0 : i32
    %c0_i32_0 = arith.constant 0 : i32
    %c0_i32_1 = arith.constant 0 : i32
    return %c0_i32, %c0_i32_0 : i32, i32
  }
  func.func @transform_1(%arg0: i32, %arg1: i32) -> (i32, i32) {
    %c0_i32 = arith.constant 0 : i32
    return %arg1, %arg0 : i32, i32
  }
  func.func @transform_2(%arg0: i32, %arg1: i32) -> (i32, i32) {
    %c0_i32 = arith.constant 0 : i32
    %c0_i32_0 = arith.constant 0 : i32
    return %c0_i32, %arg0 : i32, i32
  }
  func.func @transform_3(%arg0: i32, %arg1: i32) -> (i32, i32) {
    %c0_i32 = arith.constant 0 : i32
    %c0_i32_0 = arith.constant 0 : i32
    return %c0_i32, %arg0 : i32, i32
  }
  func.func @transform_4(%arg0: i32, %arg1: i32) -> (i32, i32) {
    %c0_i32 = arith.constant 0 : i32
    %c0_i32_0 = arith.constant 0 : i32
    return %c0_i32, %arg0 : i32, i32
  }
}

</mosaic_0001>

<llo_original>
// kernel: frames_forward.3
$region0: #{frames_forward.3}
  #allocation0 [shape = 'u32[]', space=smem, size = 0x4, offset = 0x4, fixed_abs, tag = 'smem constant byte address 0x4 - core index']
  #allocation1 [shape = 'u32[144,128]{1,0:T(1,128)}', space=vmem, size = 0x12000, scoped, tag = 'internal scratch']
  #allocation2 [shape = 'f32[2,128]{1,0:T(2,128)}', space=vmem, size = 0x400, scoped, tag = 'scratch operand']
  %s0 = inlined_call_operand.vmem [shape: bf16[2,512], index: 0, kind: input, shape index: {}]
  %s1 = inlined_call_operand.vmem [shape: s8[512,256], index: 1, kind: input, shape index: {}]
  %s2 = inlined_call_operand.vmem [shape: f32[1,256], index: 2, kind: input, shape index: {}]
  %s3 = inlined_call_operand.vmem [shape: f32[1,256], index: 3, kind: input, shape index: {}]
  %s4 = inlined_call_operand.hbm [shape: f32[2,256], index: 4, kind: output, shape index: {}]
  %s5 = sld [smem:[#allocation0]]
  $region95: #{frames_forward.3} parent=0
    _
  %s7 = ssub.s32 1, %s5
  %s8 = scalar_select 0, %s7, %s5
  $region1: #{frames_forward.3} parent=0
    #allocation3 [shape = 'u8[131072]{0}', space=vmem, size = 0x20000, scoped, tag = 'input window, operand 1']
    #allocation4 [shape = 'u8[2048]{0}', space=vmem, size = 0x800, scoped, tag = 'output window, operand 0']
    #allocation5 [shape = 's32[2]{0}', space=sflag, size = 0x8, scoped, tag = 'scoped memory for frames_forward.3']
    %9 = vsyncpa [#allocation5], 0
    %s10 = scalar_lea.sflag [#allocation5], 1
    %11 = vsyncpa %s10, 0
    loop: start=0, step=1, limit=4
    $region2: #{frames_forward.3} parent=1 // loop_pre_header
      _
    $region3: #{frames_forward.3} parent=1 // loop_header
      %s13 = sphi 0, %s17
      %p14 = scmp.ge.s32.totalorder %s13, 4
      %s20 = sphi 0, %s32
      %s21 = sphi 0, %s28
      %s22 = sphi 0, %s20
      %s23 = sphi 0, %s21
      %s24 = sphi 0, %s22
      %s25 = sphi 0, %s23
      %s33 = sphi 0, %s33
      %s35 = sphi 0, %s33
      %s36 = sphi 0, %s35
      %s50 = sphi 0, %s36
      %s58 = sphi 0, %s60
      %s61 = sphi 0, %s58
      %s62 = sphi 0, %s61
      %s78 = sphi 0, %s62
      %s84 = sphi 0, %s86
      %s87 = sphi 0, %s84
      %s88 = sphi 0, %s87
      %s104 = sphi 0, %s88
      %s110 = sphi 0, %s112
      %s113 = sphi 0, %s110
      %s114 = sphi 0, %s113
      %s130 = sphi 0, %s114
      %s136 = sphi 0, %s138
      %s139 = sphi 0, %s136
      %s140 = sphi 0, %s139
      %s156 = sphi 0, %s140
    $region4: #{frames_forward.3} parent=1 // loop_header_branch
      %16 = sbr.rel (%p14) target = $region8
    $region5: #{frames_forward.3} parent=1 // loop_body
      %s18 = ssub.s32 %s13, 1
      %s19 = ssub.s32 %s13, 2
      %s26 = sadd.s32 1, %s21
      %p27 = scmp.ge.s32.totalorder %s26, 1
      %s28 = scalar_select %p27, 0, %s26
      %s29 = sadd.s32 1, %s20
      %s30 = scalar_select %p27, %s29, %s20
      %p31 = scmp.ge.s32.totalorder %s30, 2
      %s32 = scalar_select %p31, 0, %s30
      %s34 = sadd.s32 %s33, 1
      %p37 = scmp.eq.s32.totalorder %s13, 1
      %p38 = scmp.ne.s32.totalorder %s33, %s35
      %p39 = scmp.eq.s32.totalorder %s13, 0
      %p40 = por %p38, %p39
      %p41 = scmp.ne.s32.totalorder %s33, %s35
      %p42 = scmp.eq.s32.totalorder %s18, 1
      %p43 = por %p41, %p42
      %p44 = scmp.ne.s32.totalorder %s35, %s36
      %p45 = scmp.eq.s32.totalorder %s18, 0
      %p46 = por %p44, %p45
      %p47 = scmp.ne.s32.totalorder %s35, %s36
      %p48 = scmp.eq.s32.totalorder %s19, 1
      %p49 = por %p47, %p48
      %p51 = scmp.ne.s32.totalorder %s36, %s50
      %p52 = scmp.eq.s32.totalorder %s19, 0
      %p53 = por %p51, %p52
      %s54 = ssub.s32 %s21, %s28
      %s55 = ssub.s32 %s20, %s32
      %s56 = sor.u32 %s54, %s55
      %p57 = scmp.eq.s32.totalorder %s56, 0
      %s59 = sadd.s32 %s58, 1
      %s60 = scalar_select %p57, %s58, %s59
      %p63 = pneg %p57
      %p64 = scmp.eq.s32.totalorder %s13, 1
      %p65 = por %p63, %p64
      %p66 = scmp.ne.s32.totalorder %s58, %s61
      %p67 = scmp.eq.s32.totalorder %s13, 0
      %p68 = por %p66, %p67
      %p69 = scmp.ne.s32.totalorder %s58, %s61
      %p70 = scmp.eq.s32.totalorder %s18, 1
      %p71 = por %p69, %p70
      %p72 = scmp.ne.s32.totalorder %s61, %s62
      %p73 = scmp.eq.s32.totalorder %s18, 0
      %p74 = por %p72, %p73
      %p75 = scmp.ne.s32.totalorder %s61, %s62
      %p76 = scmp.eq.s32.totalorder %s19, 1
      %p77 = por %p75, %p76
      %p79 = scmp.ne.s32.totalorder %s62, %s78
      %p80 = scmp.eq.s32.totalorder %s19, 0
      %p81 = por %p79, %p80
      %s82 = ssub.s32 %s20, %s32
      %p83 = scmp.eq.s32.totalorder %s82, 0
      %s85 = sadd.s32 %s84, 1
      %s86 = scalar_select %p83, %s84, %s85
      %p89 = pneg %p83
      %p90 = scmp.eq.s32.totalorder %s13, 1
      %p91 = por %p89, %p90
      %p92 = scmp.ne.s32.totalorder %s84, %s87
      %p93 = scmp.eq.s32.totalorder %s13, 0
      %p94 = por %p92, %p93
      %p95 = scmp.ne.s32.totalorder %s84, %s87
      %p96 = scmp.eq.s32.totalorder %s18, 1
      %p97 = por %p95, %p96
      %p98 = scmp.ne.s32.totalorder %s87, %s88
      %p99 = scmp.eq.s32.totalorder %s18, 0
      %p100 = por %p98, %p99
      %p101 = scmp.ne.s32.totalorder %s87, %s88
      %p102 = scmp.eq.s32.totalorder %s19, 1
      %p103 = por %p101, %p102
      %p105 = scmp.ne.s32.totalorder %s88, %s104
      %p106 = scmp.eq.s32.totalorder %s19, 0
      %p107 = por %p105, %p106
      %s108 = ssub.s32 %s20, %s32
      %p109 = scmp.eq.s32.totalorder %s108, 0
      %s111 = sadd.s32 %s110, 1
      %s112 = scalar_select %p109, %s110, %s111
      %p115 = pneg %p109
      %p116 = scmp.eq.s32.totalorder %s13, 1
      %p117 = por %p115, %p116
      %p118 = scmp.ne.s32.totalorder %s110, %s113
      %p119 = scmp.eq.s32.totalorder %s13, 0
      %p120 = por %p118, %p119
      %p121 = scmp.ne.s32.totalorder %s110, %s113
      %p122 = scmp.eq.s32.totalorder %s18, 1
      %p123 = por %p121, %p122
      %p124 = scmp.ne.s32.totalorder %s113, %s114
      %p125 = scmp.eq.s32.totalorder %s18, 0
      %p126 = por %p124, %p125
      %p127 = scmp.ne.s32.totalorder %s113, %s114
      %p128 = scmp.eq.s32.totalorder %s19, 1
      %p129 = por %p127, %p128
      %p131 = scmp.ne.s32.totalorder %s114, %s130
      %p132 = scmp.eq.s32.totalorder %s19, 0
      %p133 = por %p131, %p132
      %s134 = ssub.s32 %s20, %s32
      %p135 = scmp.eq.s32.totalorder %s134, 0
      %s137 = sadd.s32 %s136, 1
      %s138 = scalar_select %p135, %s136, %s137
      %p141 = pneg %p135
      %p142 = scmp.eq.s32.totalorder %s13, 1
      %p143 = por %p141, %p142
      %p144 = scmp.ne.s32.totalorder %s136, %s139
      %p145 = scmp.eq.s32.totalorder %s13, 0
      %p146 = por %p144, %p145
      %p147 = scmp.ne.s32.totalorder %s136, %s139
      %p148 = scmp.eq.s32.totalorder %s18, 1
      %p149 = por %p147, %p148
      %p150 = scmp.ne.s32.totalorder %s139, %s140
      %p151 = scmp.eq.s32.totalorder %s18, 0
      %p152 = por %p150, %p151
      %p153 = scmp.ne.s32.totalorder %s139, %s140
      %p154 = scmp.eq.s32.totalorder %s19, 1
      %p155 = por %p153, %p154
      %p157 = scmp.ne.s32.totalorder %s140, %s156
      %p158 = scmp.eq.s32.totalorder %s19, 0
      %p159 = por %p157, %p158
      %p160 = scmp.le.s32.totalorder 1, %s13
      %p161 = scmp.lt.s32.totalorder %s13, 3
      %p162 = pnand %p160, %p161
      %p163 = pneg %p162
      // Predicated region
      $region9: #{frames_forward.3} parent=5 // pred_check
        _
      $region10: #{frames_forward.3} parent=5 // pred_check_branch
        %165 = sbr.rel (%p162) target = $region12
      $region11: #{frames_forward.3} parent=5 // pred_region
        %s166 = ssub.s32 %s13, 1
        // Predicated region
        $region13: #{frames_forward.3} parent=11 // pred_check
          %p167 = pneg %p46
        $region14: #{frames_forward.3} parent=11 // pred_check_branch
          %169 = sbr.rel (%p167) target = $region16
        $region15: #{frames_forward.3} parent=11 // pred_region
          _
        $region16: #{frames_forward.3} parent=11 // pred_fallthru
          _
      $region12: #{frames_forward.3} parent=5 // pred_fallthru
        _
      %p170 = scmp.lt.s32.totalorder %s13, 2
      // Predicated region
      $region17: #{frames_forward.3} parent=5 // pred_check
        %p171 = pneg %p170
      $region18: #{frames_forward.3} parent=5 // pred_check_branch
        %173 = sbr.rel (%p171) target = $region20
      $region19: #{frames_forward.3} parent=5 // pred_region
        // Predicated region
        $region21: #{frames_forward.3} parent=19 // pred_check
          %p174 = pneg %p68
        $region22: #{frames_forward.3} parent=19 // pred_check_branch
          %176 = sbr.rel (%p174) target = $region24
        $region23: #{frames_forward.3} parent=19 // pred_region
          %s177 = sand.u32 %s58, 1
          %s178 = sand.u32 %s58, 1
          %s179 = smul.addr %s178, 128
          %s180 = scalar_lea.vmem [#allocation3], %s179
          %s181 = smul.u32 16, %s21
          %s182 = smul.addr %s181, 2
          %s183 = sadd.s32 %s20, %s182
          %s184 = smul.addr %s183, 8
          %s185 = scalar_lea.vmem %s1, %s184
          // Predicated region
          $region25: #{frames_forward.3} parent=23 // pred_check
            _
          $region26: #{frames_forward.3} parent=23 // pred_check_branch
            %187 = sbr.rel (0) target = $region28
          $region27: #{frames_forward.3} parent=23 // pred_region
            // Predicated region
            $region29: #{frames_forward.3} parent=27 // pred_check
              _
            $region30: #{frames_forward.3} parent=27 // pred_check_branch
              %189 = sbr.rel (0) target = $region32
            $region31: #{frames_forward.3} parent=27 // pred_region
              // Predicated region
              $region44: #{frames_forward.3} parent=31 // pred_check
                _
              $region45: #{frames_forward.3} parent=31 // pred_check_branch
                %235 = sbr.rel (0) target = $region47
              $region46: #{frames_forward.3} parent=31 // pred_region
                loop: start=0, step=1, limit=1
                $region48: #{frames_forward.3} parent=46 // loop_pre_header
                  _
                $region49: #{frames_forward.3} parent=46 // loop_header
                  %s237 = sphi 0, %s241
                  %p238 = scmp.ge.s32.totalorder %s237, 1
                  %s242 = sphi %s185, %s185
                  %s243 = sphi %s180, %s180
                $region50: #{frames_forward.3} parent=46 // loop_header_branch
                  %240 = sbr.rel (%p238) target = $region54
                $region51: #{frames_forward.3} parent=46 // loop_body
                  %v244 = vld [vmem:[%s242] sm:$0xff]
                  %245 = vst [vmem:[%s243] sm:$0xff] %v244
                  %v246 = vld [vmem:[%s242 + $0x10] sm:$0xff]
                  %247 = vst [vmem:[%s243 + $0x8] sm:$0xff] %v246
                  %v248 = vld [vmem:[%s242 + $0x20] sm:$0xff]
                  %249 = vst [vmem:[%s243 + $0x10] sm:$0xff] %v248
                  %v250 = vld [vmem:[%s242 + $0x30] sm:$0xff]
                  %251 = vst [vmem:[%s243 + $0x18] sm:$0xff] %v250
                  %v252 = vld [vmem:[%s242 + $0x40] sm:$0xff]
                  %253 = vst [vmem:[%s243 + $0x20] sm:$0xff] %v252
                  %v254 = vld [vmem:[%s242 + $0x50] sm:$0xff]
                  %255 = vst [vmem:[%s243 + $0x28] sm:$0xff] %v254
                  %v256 = vld [vmem:[%s242 + $0x60] sm:$0xff]
                  %257 = vst [vmem:[%s243 + $0x30] sm:$0xff] %v256
                  %v258 = vld [vmem:[%s242 + $0x70] sm:$0xff]
                  %259 = vst [vmem:[%s243 + $0x38] sm:$0xff] %v258
                  %v260 = vld [vmem:[%s242 + $0x80] sm:$0xff]
                  %261 = vst [vmem:[%s243 + $0x40] sm:$0xff] %v260
                  %v262 = vld [vmem:[%s242 + $0x90] sm:$0xff]
                  %263 = vst [vmem:[%s243 + $0x48] sm:$0xff] %v262
                  %v264 = vld [vmem:[%s242 + $0xa0] sm:$0xff]
                  %265 = vst [vmem:[%s243 + $0x50] sm:$0xff] %v264
                  %v266 = vld [vmem:[%s242 + $0xb0] sm:$0xff]
                  %267 = vst [vmem:[%s243 + $0x58] sm:$0xff] %v266
                  %v268 = vld [vmem:[%s242 + $0xc0] sm:$0xff]
                  %269 = vst [vmem:[%s243 + $0x60] sm:$0xff] %v268
                  %v270 = vld [vmem:[%s242 + $0xd0] sm:$0xff]
                  %271 = vst [vmem:[%s243 + $0x68] sm:$0xff] %v270
                  %v272 = vld [vmem:[%s242 + $0xe0] sm:$0xff]
                  %273 = vst [vmem:[%s243 + $0x70] sm:$0xff] %v272
                  %v274 = vld [vmem:[%s242 + $0xf0] sm:$0xff]
                  %275 = vst [vmem:[%s243 + $0x78] sm:$0xff] %v274
                $region52: #{frames_forward.3} parent=46 // loop_footer
                  %s241 = sadd.s32 1, %s237
                $region53: #{frames_forward.3} parent=46 // loop_footer_branch
                  %236 = sbr.rel target = $region49
                $region54: #{frames_forward.3} parent=46 // loop_exit
                  _
              $region47: #{frames_forward.3} parent=31 // pred_fallthru
                _
              // Predicated region
              $region55: #{frames_forward.3} parent=31 // pred_check
                _
              $region56: #{frames_forward.3} parent=31 // pred_check_branch
                %277 = sbr.rel target = $region58
              $region57: #{frames_forward.3} parent=31 // pred_region
                _
              $region58: #{frames_forward.3} parent=31 // pred_fallthru
                _
            $region32: #{frames_forward.3} parent=27 // pred_fallthru
              _
            // Predicated region
            $region33: #{frames_forward.3} parent=27 // pred_check
              _
            $region34: #{frames_forward.3} parent=27 // pred_check_branch
              %191 = sbr.rel target = $region36
            $region35: #{frames_forward.3} parent=27 // pred_region
              %s193 = ssub.s32 256, 1
              loop: start=0, step=1, limit=1
              $region37: #{frames_forward.3} parent=35 // loop_pre_header
                _
              $region38: #{frames_forward.3} parent=35 // loop_header
                %s195 = sphi 0, %s199
                %p196 = scmp.ge.s32.totalorder %s195, 1
                %s200 = sphi %s185, %s185
                %s201 = sphi %s180, %s180
              $region39: #{frames_forward.3} parent=35 // loop_header_branch
                %198 = sbr.rel (%p196) target = $region43
              $region40: #{frames_forward.3} parent=35 // loop_body
                %v202 = vld [vmem:[%s200] sm:%s193]
                %203 = vst [vmem:[%s201] sm:%s193] %v202
                %v204 = vld [vmem:[%s200 + $0x10] sm:%s193]
                %205 = vst [vmem:[%s201 + $0x8] sm:%s193] %v204
                %v206 = vld [vmem:[%s200 + $0x20] sm:%s193]
                %207 = vst [vmem:[%s201 + $0x10] sm:%s193] %v206
                %v208 = vld [vmem:[%s200 + $0x30] sm:%s193]
                %209 = vst [vmem:[%s201 + $0x18] sm:%s193] %v208
                %v210 = vld [vmem:[%s200 + $0x40] sm:%s193]
                %211 = vst [vmem:[%s201 + $0x20] sm:%s193] %v210
                %v212 = vld [vmem:[%s200 + $0x50] sm:%s193]
                %213 = vst [vmem:[%s201 + $0x28] sm:%s193] %v212
                %v214 = vld [vmem:[%s200 + $0x60] sm:%s193]
                %215 = vst [vmem:[%s201 + $0x30] sm:%s193] %v214
                %v216 = vld [vmem:[%s200 + $0x70] sm:%s193]
                %217 = vst [vmem:[%s201 + $0x38] sm:%s193] %v216
                %v218 = vld [vmem:[%s200 + $0x80] sm:%s193]
                %219 = vst [vmem:[%s201 + $0x40] sm:%s193] %v218
                %v220 = vld [vmem:[%s200 + $0x90] sm:%s193]
                %221 = vst [vmem:[%s201 + $0x48] sm:%s193] %v220
                %v222 = vld [vmem:[%s200 + $0xa0] sm:%s193]
                %223 = vst [vmem:[%s201 + $0x50] sm:%s193] %v222
                %v224 = vld [vmem:[%s200 + $0xb0] sm:%s193]
                %225 = vst [vmem:[%s201 + $0x58] sm:%s193] %v224
                %v226 = vld [vmem:[%s200 + $0xc0] sm:%s193]
                %227 = vst [vmem:[%s201 + $0x60] sm:%s193] %v226
                %v228 = vld [vmem:[%s200 + $0xd0] sm:%s193]
                %229 = vst [vmem:[%s201 + $0x68] sm:%s193] %v228
                %v230 = vld [vmem:[%s200 + $0xe0] sm:%s193]
                %231 = vst [vmem:[%s201 + $0x70] sm:%s193] %v230
                %v232 = vld [vmem:[%s200 + $0xf0] sm:%s193]
                %233 = vst [vmem:[%s201 + $0x78] sm:%s193] %v232
              $region41: #{frames_forward.3} parent=35 // loop_footer
                %s199 = sadd.s32 1, %s195
              $region42: #{frames_forward.3} parent=35 // loop_footer_branch
                %194 = sbr.rel target = $region38
              $region43: #{frames_forward.3} parent=35 // loop_exit
                _
            $region36: #{frames_forward.3} parent=27 // pred_fallthru
              _
          $region28: #{frames_forward.3} parent=23 // pred_fallthru
            _
          %278 = vnop
        $region24: #{frames_forward.3} parent=19 // pred_fallthru
          _
        // Predicated region
        $region59: #{frames_forward.3} parent=19 // pred_check
          %p279 = pneg %p94
        $region60: #{frames_forward.3} parent=19 // pred_check_branch
          %281 = sbr.rel (%p279) target = $region62
        $region61: #{frames_forward.3} parent=19 // pred_region
          %p282 = scmp.lt.s32.totalorder %s20, 1
          %s283 = scalar_select %p282, %s20, 1
          %s284 = scalar_lea.vmem %s2, %s283
        $region62: #{frames_forward.3} parent=19 // pred_fallthru
          _
        // Predicated region
        $region63: #{frames_forward.3} parent=19 // pred_check
          %p285 = pneg %p120
        $region64: #{frames_forward.3} parent=19 // pred_check_branch
          %287 = sbr.rel (%p285) target = $region66
        $region65: #{frames_forward.3} parent=19 // pred_region
          %p288 = scmp.lt.s32.totalorder %s20, 1
          %s289 = scalar_select %p288, %s20, 1
          %s290 = scalar_lea.vmem %s3, %s289
        $region66: #{frames_forward.3} parent=19 // pred_fallthru
          _
      $region20: #{frames_forward.3} parent=5 // pred_fallthru
        _
      %p291 = scmp.le.s32.totalorder 1, %s13
      %p292 = scmp.lt.s32.totalorder %s13, 3
      %p293 = pnand %p291, %p292
      %p294 = pneg %p293
      // Predicated region
      $region67: #{frames_forward.3} parent=5 // pred_check
        _
      $region68: #{frames_forward.3} parent=5 // pred_check_branch
        %296 = sbr.rel (%p293) target = $region70
      $region69: #{frames_forward.3} parent=5 // pred_region
        %s297 = ssub.s32 %s13, 1
        %s298 = sand.u32 %s61, 1
        %s299 = sand.u32 %s61, 1
        %s300 = smul.addr %s299, 128
        %s301 = scalar_lea.vmem [#allocation3], %s300
        // Predicated region
        $region71: #{frames_forward.3} parent=69 // pred_check
          %p302 = pneg %p74
        $region72: #{frames_forward.3} parent=69 // pred_check_branch
          %304 = sbr.rel (%p302) target = $region74
        $region73: #{frames_forward.3} parent=69 // pred_region
          _
        $region74: #{frames_forward.3} parent=69 // pred_fallthru
          _
        %p305 = pneg %p46
        %p306 = pneg %p43
        %s307 = sand.u32 %s61, 1
        %s308 = sand.u32 %s61, 1
        %s309 = smul.addr %s308, 128
        %s310 = scalar_lea.vmem [#allocation3], %s309
        %p311 = pneg %p74
        %p312 = pneg %p71
        %p313 = scmp.lt.s32.totalorder %s22, 1
        %s314 = scalar_select %p313, %s22, 1
        %s315 = scalar_lea.vmem %s2, %s314
        %p316 = pneg %p100
        %p317 = pneg %p97
        %p318 = scmp.lt.s32.totalorder %s22, 1
        %s319 = scalar_select %p318, %s22, 1
        %s320 = scalar_lea.vmem %s3, %s319
        %p321 = pneg %p126
        %p322 = pneg %p123
        %p323 = pneg %p152
        %p324 = pneg %p149
        %s325 = sand.u32 %s139, 1
        %s326 = scalar_lea.sflag [#allocation5], %s325
        %s327 = sand.u32 %s139, 1
        %s328 = smul.addr %s327, 2
        %s329 = scalar_lea.vmem [#allocation4], %s328
        %s330 = smul.u32 16, %s23
        %p331 = scmp.lt.s32.totalorder %s22, 1
        %s332 = scalar_select %p331, %s22, 1
        %s333 = scalar_lea.vmem %s2, %s332
        %p334 = scmp.lt.s32.totalorder %s22, 1
        %s335 = scalar_select %p334, %s22, 1
        %s336 = scalar_lea.vmem %s3, %s335
        %p338 = scmp.eq.s32.totalorder %s23, 0
        // Predicated region
        $region75: #{frames_forward.3} parent=69 // pred_check
          %p339 = pneg %p338
        $region76: #{frames_forward.3} parent=69 // pred_check_branch
          %341 = sbr.rel (%p339) target = $region78
        $region77: #{frames_forward.3} parent=69 // pred_region
          %342 = vst [vmem:[#allocation2] sm:$0x3] 0.0
        $region78: #{frames_forward.3} parent=69 // pred_fallthru
          _
        %s343 = smul.u32 %s23, 512
        %s344 = sshra.s32 %s343, 7
        %s345 = sand.u32 %s343, 127
        %s346 = scalar_lea.vmem %s0, %s344
        %v347 = vld [vmem:[%s346] sm:$0xf]
        %v348 = vld [vmem:[%s301] sm:$0xff]
        %v349 = vld [vmem:[%s301 + $0x8] sm:$0xff]
        %v350 = vld [vmem:[%s301 + $0x10] sm:$0xff]
        %v351 = vld [vmem:[%s301 + $0x18] sm:$0xff]
        %v352 = vld [vmem:[%s301 + $0x20] sm:$0xff]
        %v353 = vld [vmem:[%s301 + $0x28] sm:$0xff]
        %v354 = vld [vmem:[%s301 + $0x30] sm:$0xff]
        %v355 = vld [vmem:[%s301 + $0x38] sm:$0xff]
        %v356 = vld [vmem:[%s301 + $0x40] sm:$0xff]
        %v357 = vld [vmem:[%s301 + $0x48] sm:$0xff]
        %v358 = vld [vmem:[%s301 + $0x50] sm:$0xff]
        %v359 = vld [vmem:[%s301 + $0x58] sm:$0xff]
        %v360 = vld [vmem:[%s301 + $0x60] sm:$0xff]
        %v361 = vld [vmem:[%s301 + $0x68] sm:$0xff]
        %v362 = vld [vmem:[%s301 + $0x70] sm:$0xff]
        %v363 = vld [vmem:[%s301 + $0x78] sm:$0xff]
        %v364 = vunpack.c.l.s8.bf16 %v348
        %v365 = vunpack.c.h.s8.bf16 %v348
        %v366 = vunpack.c.l.s8.bf16 %v349
        %v367 = vunpack.c.h.s8.bf16 %v349
        %v368 = vunpack.c.l.s8.bf16 %v350
        %v369 = vunpack.c.h.s8.bf16 %v350
        %v370 = vunpack.c.l.s8.bf16 %v351
        %v371 = vunpack.c.h.s8.bf16 %v351
        %v372 = vunpack.c.l.s8.bf16 %v352
        %v373 = vunpack.c.h.s8.bf16 %v352
        %v374 = vunpack.c.l.s8.bf16 %v353
        %v375 = vunpack.c.h.s8.bf16 %v353
        %v376 = vunpack.c.l.s8.bf16 %v354
        %v377 = vunpack.c.h.s8.bf16 %v354
        %v378 = vunpack.c.l.s8.bf16 %v355
        %v379 = vunpack.c.h.s8.bf16 %v355
        %v380 = vunpack.c.l.s8.bf16 %v356
        %v381 = vunpack.c.h.s8.bf16 %v356
        %v382 = vunpack.c.l.s8.bf16 %v357
        %v383 = vunpack.c.h.s8.bf16 %v357
        %v384 = vunpack.c.l.s8.bf16 %v358
        %v385 = vunpack.c.h.s8.bf16 %v358
        %v386 = vunpack.c.l.s8.bf16 %v359
        %v387 = vunpack.c.h.s8.bf16 %v359
        %v388 = vunpack.c.l.s8.bf16 %v360
        %v389 = vunpack.c.h.s8.bf16 %v360
        %v390 = vunpack.c.l.s8.bf16 %v361
        %v391 = vunpack.c.h.s8.bf16 %v361
        %v392 = vunpack.c.l.s8.bf16 %v362
        %v393 = vunpack.c.h.s8.bf16 %v362
        %v394 = vunpack.c.l.s8.bf16 %v363
        %v395 = vunpack.c.h.s8.bf16 %v363
        %v396 = vld [vmem:[#allocation2] sm:$0x3]
        %v399 = vunpack.c.l.s4 1966171168
        %v400 = vunpack.c.0.s8 %v399
        %v401 = vlaneseq
        %v402 = vshrl.u32 %v401, 7
        %v403 = vsub.s32 %v400, %v402
        %v404 = vrot.slane %v347, %v403
        %v405 = vcombine.high %v404, %v404
        %v407 = vunpack.c.l.s4 1966171168
        %v408 = vunpack.c.0.s8 %v407
        %v409 = vlaneseq
        %v410 = vshrl.u32 %v409, 7
        %v411 = vsub.s32 %v408, %v410
        %v412 = vrot.slane %v404, %v411
        %v414 = vunpack.c.l.s4 1966171168
        %v415 = vunpack.c.0.s8 %v414
        %v416 = vlaneseq
        %v417 = vshrl.u32 %v416, 7
        %v418 = vsub.s32 %v415, %v417
        %v419 = vrot.slane %v405, %v418
        %v420 = vcombine.high %v412, %v412
        %v421 = vcombine.high %v419, %v419
        %426 = vmatprep.subr.bf16.mxu0 0
        %427 = vmatpush1.bf16.msra.mxu0 %v371
        %428 = vmatprep.subr.bf16.mxu0 0
        %429 = vmatpush1.bf16.msra.mxu0 %v370
        %430 = vmatprep.subr.bf16.mxu0 0
        %431 = vmatpush1.bf16.msra.mxu0 %v369
        %432 = vmatprep.subr.bf16.mxu0 0
        %433 = vmatpush1.bf16.msra.mxu0 %v368
        %434 = vmatprep.subr.bf16.mxu0 0
        %435 = vmatpush1.bf16.msra.mxu0 %v367
        %436 = vmatprep.subr.bf16.mxu0 0
        %437 = vmatpush1.bf16.msra.mxu0 %v366
        %438 = vmatprep.subr.bf16.mxu0 0
        %439 = vmatpush1.bf16.msra.mxu0 %v365
        %440 = vmatprep.subr.bf16.mxu0 0
        %441 = vmatpush1.bf16.msra.mxu0 %v364
        %442 = vmatprep.subr.bf16.mxu0 0
        %443 = vmatpush2.bf16.msra.mxu0 %v379
        %444 = vmatprep.subr.bf16.mxu0 0
        %445 = vmatpush2.bf16.msra.mxu0 %v378
        %446 = vmatprep.subr.bf16.mxu0 0
        %447 = vmatpush2.bf16.msra.mxu0 %v377
        %448 = vmatprep.subr.bf16.mxu0 0
        %449 = vmatpush2.bf16.msra.mxu0 %v376
        %450 = vmatprep.subr.bf16.mxu0 0
        %451 = vmatpush2.bf16.msra.mxu0 %v375
        %452 = vmatprep.subr.bf16.mxu0 0
        %453 = vmatpush2.bf16.msra.mxu0 %v374
        %454 = vmatprep.subr.bf16.mxu0 0
        %455 = vmatpush2.bf16.msra.mxu0 %v373
        %456 = vmatprep.subr.bf16.mxu0 0
        %457 = vmatpush2.bf16.msra.mxu0 %v372
        %458 = vmatprep.mubr.bf16.mxu0 %v419
        %459 = vmatmul.mubr.bf16.gmra.mxu0 %v412
        %v460 = vpop.f32.mrf.mxu0
        %v461 = vadd.f32 0.0, %v460
        %v462 = vpop.f32.mrf.mxu0
        %v463 = vpop.f32.mrf.mxu0
        %v464 = vpop.f32.mrf.mxu0
        %465 = vdwg.mxu0
        %466 = vmatprep.subr.bf16.mxu0 0
        %467 = vmatpush1.bf16.msra.mxu0 %v387
        %468 = vmatprep.subr.bf16.mxu0 0
        %469 = vmatpush1.bf16.msra.mxu0 %v386
        %470 = vmatprep.subr.bf16.mxu0 0
        %471 = vmatpush1.bf16.msra.mxu0 %v385
        %472 = vmatprep.subr.bf16.mxu0 0
        %473 = vmatpush1.bf16.msra.mxu0 %v384
        %474 = vmatprep.subr.bf16.mxu0 0
        %475 = vmatpush1.bf16.msra.mxu0 %v383
        %476 = vmatprep.subr.bf16.mxu0 0
        %477 = vmatpush1.bf16.msra.mxu0 %v382
        %478 = vmatprep.subr.bf16.mxu0 0
        %479 = vmatpush1.bf16.msra.mxu0 %v381
        %480 = vmatprep.subr.bf16.mxu0 0
        %481 = vmatpush1.bf16.msra.mxu0 %v380
        %482 = vmatprep.subr.bf16.mxu0 0
        %483 = vmatpush2.bf16.msra.mxu0 %v395
        %484 = vmatprep.subr.bf16.mxu0 0
        %485 = vmatpush2.bf16.msra.mxu0 %v394
        %486 = vmatprep.subr.bf16.mxu0 0
        %487 = vmatpush2.bf16.msra.mxu0 %v393
        %488 = vmatprep.subr.bf16.mxu0 0
        %489 = vmatpush2.bf16.msra.mxu0 %v392
        %490 = vmatprep.subr.bf16.mxu0 0
        %491 = vmatpush2.bf16.msra.mxu0 %v391
        %492 = vmatprep.subr.bf16.mxu0 0
        %493 = vmatpush2.bf16.msra.mxu0 %v390
        %494 = vmatprep.subr.bf16.mxu0 0
        %495 = vmatpush2.bf16.msra.mxu0 %v389
        %496 = vmatprep.subr.bf16.mxu0 0
        %497 = vmatpush2.bf16.msra.mxu0 %v388
        %498 = vmatprep.mubr.bf16.mxu0 %v421
        %499 = vmatmul.mubr.bf16.gmra.mxu0 %v420
        %v500 = vpop.f32.mrf.mxu0
        %v501 = vadd.f32 %v461, %v500
        %v502 = vpop.f32.mrf.mxu0
        %v503 = vpop.f32.mrf.mxu0
        %v504 = vpop.f32.mrf.mxu0
        %505 = vdwg.mxu0
        %v506 = vadd.f32 %v396, %v501
        %507 = vst [vmem:[#allocation2] sm:$0x3] %v506
        // Predicated region
        $region79: #{frames_forward.3} parent=69 // pred_check
          %p508 = pneg %p338
        $region80: #{frames_forward.3} parent=69 // pred_check_branch
          %510 = sbr.rel (%p508) target = $region82
        $region81: #{frames_forward.3} parent=69 // pred_region
          %v511 = vld [vmem:[#allocation2] sm:$0x3]
          %v512 = vld [vmem:[%s333] sm:$0x1]
          %v514 = vlaneseq
          %v515 = vshrl.u32 %v514, 7
          %v516 = vsub.s32 0, %v515
          %v517 = vrot.slane %v512, %v516
          %v519 = vmul.f32 %v511, %v517
          %v520 = vld [vmem:[%s336] sm:$0x1]
          %v522 = vlaneseq
          %v523 = vshrl.u32 %v522, 7
          %v524 = vsub.s32 0, %v523
          %v525 = vrot.slane %v520, %v524
          %v527 = vadd.f32 %v519, %v525
          %v528 = vxor.u32 %v527, 2147483648
          %v529 = vmul.f32 %v528, 1.442695
          %v530 = vpow.pop %v529
          %v531 = vadd.f32 %v530, 1.0
          %v532 = vrcp.pop %v531
          %v533 = vmul.f32 1.0, %v532
          %534 = vst [vmem:[%s329] sm:$0x3] %v533
        $region82: #{frames_forward.3} parent=69 // pred_fallthru
          _
        %s535 = sand.u32 %s139, 1
        %s536 = scalar_lea.sflag [#allocation5], %s535
        %s537 = sand.u32 %s139, 1
        %s538 = smul.addr %s537, 2
        %s539 = scalar_lea.vmem [#allocation4], %s538
        // Predicated region
        $region83: #{frames_forward.3} parent=69 // pred_check
          %p540 = pneg %p149
        $region84: #{frames_forward.3} parent=69 // pred_check_branch
          %542 = sbr.rel (%p540) target = $region86
        $region85: #{frames_forward.3} parent=69 // pred_region
          %s544 = ssub.s32 32, 32
          %545 = vsyncadd %s536, %s544
          %s546 = smul.addr %s22, 32
          %s547 = scalar_lea.hbm %s4, %s546
          %s549 = sshll.u32 %s539, 4
          %s550 = int_to_ptr.vmem [resolvable:$true] %s549
          %552 = dma.vmem_to_hbm [thread:$0]  %s550, 32, %s547, %s536
        $region86: #{frames_forward.3} parent=69 // pred_fallthru
          _
      $region70: #{frames_forward.3} parent=5 // pred_fallthru
        _
      %p553 = scmp.le.s32.totalorder 2, %s13
      // Predicated region
      $region87: #{frames_forward.3} parent=5 // pred_check
        %p554 = pneg %p553
      $region88: #{frames_forward.3} parent=5 // pred_check_branch
        %556 = sbr.rel (%p554) target = $region90
      $region89: #{frames_forward.3} parent=5 // pred_region
        %s557 = ssub.s32 %s13, 2
        // Predicated region
        $region91: #{frames_forward.3} parent=89 // pred_check
          %p558 = pneg %p155
        $region92: #{frames_forward.3} parent=89 // pred_check_branch
          %560 = sbr.rel (%p558) target = $region94
        $region93: #{frames_forward.3} parent=89 // pred_region
          %s561 = sand.u32 %s140, 1
          %s562 = scalar_lea.sflag [#allocation5], %s561
          %s563 = sand.u32 %s140, 1
          %s564 = smul.addr %s563, 2
          %s565 = scalar_lea.vmem [#allocation4], %s564
          %566 = dma.done %s562, 32
        $region94: #{frames_forward.3} parent=89 // pred_fallthru
          _
      $region90: #{frames_forward.3} parent=5 // pred_fallthru
        _
    $region6: #{frames_forward.3} parent=1 // loop_footer
      %s17 = sadd.s32 1, %s13
    $region7: #{frames_forward.3} parent=1 // loop_footer_branch
      %12 = sbr.rel target = $region3
    $region8: #{frames_forward.3} parent=1 // loop_exit
      _
    %567 = vsyncpa [#allocation5], 1
    %s568 = scalar_lea.sflag [#allocation5], 1
    %569 = vsyncpa %s568, 1

// kernel: frames_forward.2
$region0: #{frames_forward.2}
  #allocation0 [shape = 'u32[]', space=smem, size = 0x4, offset = 0x4, fixed_abs, tag = 'smem constant byte address 0x4 - core index']
  #allocation1 [shape = 'u32[144,128]{1,0:T(1,128)}', space=vmem, size = 0x12000, scoped, tag = 'internal scratch']
  #allocation2 [shape = 'f32[2,256]{1,0:T(2,128)}', space=vmem, size = 0x800, scoped, tag = 'scratch operand']
  %s0 = inlined_call_operand.vmem [shape: bf16[2,2304], index: 0, kind: input, shape index: {}]
  %s1 = inlined_call_operand.hbm [shape: s8[2304,512], index: 1, kind: input, shape index: {}]
  %s2 = inlined_call_operand.hbm [shape: f32[1,512], index: 2, kind: input, shape index: {}]
  %s3 = inlined_call_operand.hbm [shape: f32[1,512], index: 3, kind: input, shape index: {}]
  %s4 = inlined_call_operand.vmem [shape: bf16[2,512], index: 4, kind: output, shape index: {}]
  %s5 = sld [smem:[#allocation0]]
  $region69: #{frames_forward.2} parent=0
    _
  %s7 = ssub.s32 1, %s5
  %s8 = scalar_select 0, %s7, %s5
  $region1: #{frames_forward.2} parent=0
    #allocation3 [shape = 'u8[589824]{0}', space=vmem, size = 0x90000, scoped, tag = 'input window, operand 1']
    #allocation4 [shape = 's32[2]{0}', space=sflag, size = 0x8, scoped, tag = 'scoped memory for frames_forward.2']
    #allocation5 [shape = 'u8[2048]{0}', space=vmem, size = 0x800, scoped, tag = 'input window, operand 2']
    #allocation6 [shape = 's32[2]{0}', space=sflag, size = 0x8, scoped, tag = 'scoped memory for frames_forward.2']
    #allocation7 [shape = 'u8[2048]{0}', space=vmem, size = 0x800, scoped, tag = 'input window, operand 3']
    %9 = vsyncpa [#allocation4], 0
    %s10 = scalar_lea.sflag [#allocation4], 1
    %11 = vsyncpa %s10, 0
    %12 = vsyncpa [#allocation6], 0
    %s13 = scalar_lea.sflag [#allocation6], 1
    %14 = vsyncpa %s13, 0
    loop: start=0, step=1, limit=6
    $region2: #{frames_forward.2} parent=1 // loop_pre_header
      _
    $region3: #{frames_forward.2} parent=1 // loop_header
      %s16 = sphi 0, %s20
      %p17 = scmp.ge.s32.totalorder %s16, 6
      %s23 = sphi 0, %s35
      %s24 = sphi 0, %s31
      %s25 = sphi 0, %s23
      %s26 = sphi 0, %s24
      %s27 = sphi 0, %s25
      %s28 = sphi 0, %s26
      %s36 = sphi 0, %s36
      %s38 = sphi 0, %s36
      %s39 = sphi 0, %s38
      %s53 = sphi 0, %s39
      %s61 = sphi 0, %s63
      %s64 = sphi 0, %s61
      %s65 = sphi 0, %s64
      %s81 = sphi 0, %s65
      %s87 = sphi 0, %s89
      %s90 = sphi 0, %s87
      %s91 = sphi 0, %s90
      %s107 = sphi 0, %s91
      %s113 = sphi 0, %s115
      %s116 = sphi 0, %s113
      %s117 = sphi 0, %s116
      %s133 = sphi 0, %s117
      %s139 = sphi 0, %s141
      %s142 = sphi 0, %s139
      %s143 = sphi 0, %s142
      %s159 = sphi 0, %s143
    $region4: #{frames_forward.2} parent=1 // loop_header_branch
      %19 = sbr.rel (%p17) target = $region8
    $region5: #{frames_forward.2} parent=1 // loop_body
      %s21 = ssub.s32 %s16, 1
      %s22 = ssub.s32 %s16, 2
      %s29 = sadd.s32 1, %s24
      %p30 = scmp.ge.s32.totalorder %s29, 2
      %s31 = scalar_select %p30, 0, %s29
      %s32 = sadd.s32 1, %s23
      %s33 = scalar_select %p30, %s32, %s23
      %p34 = scmp.ge.s32.totalorder %s33, 2
      %s35 = scalar_select %p34, 0, %s33
      %s37 = sadd.s32 %s36, 1
      %p40 = scmp.eq.s32.totalorder %s16, 3
      %p41 = scmp.ne.s32.totalorder %s36, %s38
      %p42 = scmp.eq.s32.totalorder %s16, 0
      %p43 = por %p41, %p42
      %p44 = scmp.ne.s32.totalorder %s36, %s38
      %p45 = scmp.eq.s32.totalorder %s21, 3
      %p46 = por %p44, %p45
      %p47 = scmp.ne.s32.totalorder %s38, %s39
      %p48 = scmp.eq.s32.totalorder %s21, 0
      %p49 = por %p47, %p48
      %p50 = scmp.ne.s32.totalorder %s38, %s39
      %p51 = scmp.eq.s32.totalorder %s22, 3
      %p52 = por %p50, %p51
      %p54 = scmp.ne.s32.totalorder %s39, %s53
      %p55 = scmp.eq.s32.totalorder %s22, 0
      %p56 = por %p54, %p55
      %s57 = ssub.s32 %s24, %s31
      %s58 = ssub.s32 %s23, %s35
      %s59 = sor.u32 %s57, %s58
      %p60 = scmp.eq.s32.totalorder %s59, 0
      %s62 = sadd.s32 %s61, 1
      %s63 = scalar_select %p60, %s61, %s62
      %p66 = pneg %p60
      %p67 = scmp.eq.s32.totalorder %s16, 3
      %p68 = por %p66, %p67
      %p69 = scmp.ne.s32.totalorder %s61, %s64
      %p70 = scmp.eq.s32.totalorder %s16, 0
      %p71 = por %p69, %p70
      %p72 = scmp.ne.s32.totalorder %s61, %s64
      %p73 = scmp.eq.s32.totalorder %s21, 3
      %p74 = por %p72, %p73
      %p75 = scmp.ne.s32.totalorder %s64, %s65
      %p76 = scmp.eq.s32.totalorder %s21, 0
      %p77 = por %p75, %p76
      %p78 = scmp.ne.s32.totalorder %s64, %s65
      %p79 = scmp.eq.s32.totalorder %s22, 3
      %p80 = por %p78, %p79
      %p82 = scmp.ne.s32.totalorder %s65, %s81
      %p83 = scmp.eq.s32.totalorder %s22, 0
      %p84 = por %p82, %p83
      %s85 = ssub.s32 %s23, %s35
      %p86 = scmp.eq.s32.totalorder %s85, 0
      %s88 = sadd.s32 %s87, 1
      %s89 = scalar_select %p86, %s87, %s88
      %p92 = pneg %p86
      %p93 = scmp.eq.s32.totalorder %s16, 3
      %p94 = por %p92, %p93
      %p95 = scmp.ne.s32.totalorder %s87, %s90
      %p96 = scmp.eq.s32.totalorder %s16, 0
      %p97 = por %p95, %p96
      %p98 = scmp.ne.s32.totalorder %s87, %s90
      %p99 = scmp.eq.s32.totalorder %s21, 3
      %p100 = por %p98, %p99
      %p101 = scmp.ne.s32.totalorder %s90, %s91
      %p102 = scmp.eq.s32.totalorder %s21, 0
      %p103 = por %p101, %p102
      %p104 = scmp.ne.s32.totalorder %s90, %s91
      %p105 = scmp.eq.s32.totalorder %s22, 3
      %p106 = por %p104, %p105
      %p108 = scmp.ne.s32.totalorder %s91, %s107
      %p109 = scmp.eq.s32.totalorder %s22, 0
      %p110 = por %p108, %p109
      %s111 = ssub.s32 %s23, %s35
      %p112 = scmp.eq.s32.totalorder %s111, 0
      %s114 = sadd.s32 %s113, 1
      %s115 = scalar_select %p112, %s113, %s114
      %p118 = pneg %p112
      %p119 = scmp.eq.s32.totalorder %s16, 3
      %p120 = por %p118, %p119
      %p121 = scmp.ne.s32.totalorder %s113, %s116
      %p122 = scmp.eq.s32.totalorder %s16, 0
      %p123 = por %p121, %p122
      %p124 = scmp.ne.s32.totalorder %s113, %s116
      %p125 = scmp.eq.s32.totalorder %s21, 3
      %p126 = por %p124, %p125
      %p127 = scmp.ne.s32.totalorder %s116, %s117
      %p128 = scmp.eq.s32.totalorder %s21, 0
      %p129 = por %p127, %p128
      %p130 = scmp.ne.s32.totalorder %s116, %s117
      %p131 = scmp.eq.s32.totalorder %s22, 3
      %p132 = por %p130, %p131
      %p134 = scmp.ne.s32.totalorder %s117, %s133
      %p135 = scmp.eq.s32.totalorder %s22, 0
      %p136 = por %p134, %p135
      %s137 = ssub.s32 %s23, %s35
      %p138 = scmp.eq.s32.totalorder %s137, 0
      %s140 = sadd.s32 %s139, 1
      %s141 = scalar_select %p138, %s139, %s140
      %p144 = pneg %p138
      %p145 = scmp.eq.s32.totalorder %s16, 3
      %p146 = por %p144, %p145
      %p147 = scmp.ne.s32.totalorder %s139, %s142
      %p148 = scmp.eq.s32.totalorder %s16, 0
      %p149 = por %p147, %p148
      %p150 = scmp.ne.s32.totalorder %s139, %s142
      %p151 = scmp.eq.s32.totalorder %s21, 3
      %p152 = por %p150, %p151
      %p153 = scmp.ne.s32.totalorder %s142, %s143
      %p154 = scmp.eq.s32.totalorder %s21, 0
      %p155 = por %p153, %p154
      %p156 = scmp.ne.s32.totalorder %s142, %s143
      %p157 = scmp.eq.s32.totalorder %s22, 3
      %p158 = por %p156, %p157
      %p160 = scmp.ne.s32.totalorder %s143, %s159
      %p161 = scmp.eq.s32.totalorder %s22, 0
      %p162 = por %p160, %p161
      %p163 = scmp.le.s32.totalorder 1, %s16
      %p164 = scmp.lt.s32.totalorder %s16, 5
      %p165 = pnand %p163, %p164
      %p166 = pneg %p165
      // Predicated region
      $region9: #{frames_forward.2} parent=5 // pred_check
        _
      $region10: #{frames_forward.2} parent=5 // pred_check_branch
        %168 = sbr.rel (%p165) target = $region12
      $region11: #{frames_forward.2} parent=5 // pred_region
        %s169 = ssub.s32 %s16, 1
        // Predicated region
        $region13: #{frames_forward.2} parent=11 // pred_check
          %p170 = pneg %p49
        $region14: #{frames_forward.2} parent=11 // pred_check_branch
          %172 = sbr.rel (%p170) target = $region16
        $region15: #{frames_forward.2} parent=11 // pred_region
          _
        $region16: #{frames_forward.2} parent=11 // pred_fallthru
          _
      $region12: #{frames_forward.2} parent=5 // pred_fallthru
        _
      %p173 = scmp.lt.s32.totalorder %s16, 4
      // Predicated region
      $region17: #{frames_forward.2} parent=5 // pred_check
        %p174 = pneg %p173
      $region18: #{frames_forward.2} parent=5 // pred_check_branch
        %176 = sbr.rel (%p174) target = $region20
      $region19: #{frames_forward.2} parent=5 // pred_region
        // Predicated region
        $region21: #{frames_forward.2} parent=19 // pred_check
          %p177 = pneg %p71
        $region22: #{frames_forward.2} parent=19 // pred_check_branch
          %179 = sbr.rel (%p177) target = $region24
        $region23: #{frames_forward.2} parent=19 // pred_region
          %s180 = sand.u32 %s61, 1
          %s181 = scalar_lea.sflag [#allocation4], %s180
          %s182 = sand.u32 %s61, 1
          %s183 = smul.addr %s182, 576
          %s184 = scalar_lea.vmem [#allocation3], %s183
          %s185 = smul.u32 36, %s24
          %s186 = smul.u32 2, %s23
          %s188 = ssub.s32 9216, 9216
          %189 = vsyncadd %s181, %s188
          %s190 = smul.addr %s185, 4
          %s191 = sadd.s32 %s186, %s190
          %s192 = smul.addr %s191, 128
          %s193 = scalar_lea.hbm %s1, %s192
          %s194 = sshll.u32 %s184, 4
          %s195 = int_to_ptr.vmem [resolvable:$true] %s194
          %200 = dma.hbm_to_vmem [thread:$0]  %s193, 9216, %s195, %s181, 512, 256, 16
        $region24: #{frames_forward.2} parent=19 // pred_fallthru
          _
        // Predicated region
        $region25: #{frames_forward.2} parent=19 // pred_check
          %p201 = pneg %p97
        $region26: #{frames_forward.2} parent=19 // pred_check_branch
          %203 = sbr.rel (%p201) target = $region28
        $region27: #{frames_forward.2} parent=19 // pred_region
          %s204 = sand.u32 %s16, 1
          %s205 = scalar_lea.sflag [#allocation6], %s204
          %s206 = sand.u32 %s87, 1
          %s207 = smul.addr %s206, 2
          %s208 = scalar_lea.vmem [#allocation5], %s207
          %s209 = smul.u32 2, %s23
          %s211 = ssub.s32 32, 32
          %212 = vsyncadd %s205, %s211
          %s213 = smul.addr %s209, 16
          %s214 = scalar_lea.hbm %s2, %s213
          %s216 = sshll.u32 %s208, 4
          %s217 = int_to_ptr.vmem [resolvable:$true] %s216
          %219 = dma.hbm_to_vmem [thread:$0]  %s214, 32, %s217, %s205
        $region28: #{frames_forward.2} parent=19 // pred_fallthru
          _
        // Predicated region
        $region29: #{frames_forward.2} parent=19 // pred_check
          %p220 = pneg %p123
        $region30: #{frames_forward.2} parent=19 // pred_check_branch
          %222 = sbr.rel (%p220) target = $region32
        $region31: #{frames_forward.2} parent=19 // pred_region
          %s223 = sand.u32 %s16, 1
          %s224 = scalar_lea.sflag [#allocation6], %s223
          %s225 = sand.u32 %s113, 1
          %s226 = smul.addr %s225, 2
          %s227 = scalar_lea.vmem [#allocation7], %s226
          %s228 = smul.u32 2, %s23
          %s230 = ssub.s32 32, 32
          %231 = vsyncadd %s224, %s230
          %s232 = smul.addr %s228, 16
          %s233 = scalar_lea.hbm %s3, %s232
          %s235 = sshll.u32 %s227, 4
          %s236 = int_to_ptr.vmem [resolvable:$true] %s235
          %238 = dma.hbm_to_vmem [thread:$0]  %s233, 32, %s236, %s224
        $region32: #{frames_forward.2} parent=19 // pred_fallthru
          _
      $region20: #{frames_forward.2} parent=5 // pred_fallthru
        _
      %p239 = scmp.le.s32.totalorder 1, %s16
      %p240 = scmp.lt.s32.totalorder %s16, 5
      %p241 = pnand %p239, %p240
      %p242 = pneg %p241
      // Predicated region
      $region33: #{frames_forward.2} parent=5 // pred_check
        _
      $region34: #{frames_forward.2} parent=5 // pred_check_branch
        %244 = sbr.rel (%p241) target = $region36
      $region35: #{frames_forward.2} parent=5 // pred_region
        %s245 = ssub.s32 %s16, 1
        %s246 = sand.u32 %s64, 1
        %s247 = scalar_lea.sflag [#allocation4], %s246
        %s248 = sand.u32 %s64, 1
        %s249 = smul.addr %s248, 576
        %s250 = scalar_lea.vmem [#allocation3], %s249
        // Predicated region
        $region37: #{frames_forward.2} parent=35 // pred_check
          %p251 = pneg %p77
        $region38: #{frames_forward.2} parent=35 // pred_check_branch
          %253 = sbr.rel (%p251) target = $region40
        $region39: #{frames_forward.2} parent=35 // pred_region
          %254 = dma.done %s247, 9216
        $region40: #{frames_forward.2} parent=35 // pred_fallthru
          _
        %s255 = sand.u32 %s21, 1
        %s256 = scalar_lea.sflag [#allocation6], %s255
        %s257 = sand.u32 %s90, 1
        %s258 = smul.addr %s257, 2
        %s259 = scalar_lea.vmem [#allocation5], %s258
        // Predicated region
        $region41: #{frames_forward.2} parent=35 // pred_check
          %p260 = pneg %p103
        $region42: #{frames_forward.2} parent=35 // pred_check_branch
          %262 = sbr.rel (%p260) target = $region44
        $region43: #{frames_forward.2} parent=35 // pred_region
          %263 = dma.done %s256, 32
        $region44: #{frames_forward.2} parent=35 // pred_fallthru
          _
        %s264 = sand.u32 %s21, 1
        %s265 = scalar_lea.sflag [#allocation6], %s264
        %s266 = sand.u32 %s116, 1
        %s267 = smul.addr %s266, 2
        %s268 = scalar_lea.vmem [#allocation7], %s267
        // Predicated region
        $region45: #{frames_forward.2} parent=35 // pred_check
          %p269 = pneg %p129
        $region46: #{frames_forward.2} parent=35 // pred_check_branch
          %271 = sbr.rel (%p269) target = $region48
        $region47: #{frames_forward.2} parent=35 // pred_region
          %272 = dma.done %s265, 32
        $region48: #{frames_forward.2} parent=35 // pred_fallthru
          _
        %p273 = pneg %p49
        %p274 = pneg %p46
        %s275 = sand.u32 %s64, 1
        %s276 = scalar_lea.sflag [#allocation4], %s275
        %s277 = sand.u32 %s64, 1
        %s278 = smul.addr %s277, 576
        %s279 = scalar_lea.vmem [#allocation3], %s278
        %p280 = pneg %p77
        %p281 = pneg %p74
        %s282 = sand.u32 %s21, 1
        %s283 = scalar_lea.sflag [#allocation6], %s282
        %s284 = sand.u32 %s90, 1
        %s285 = smul.addr %s284, 2
        %s286 = scalar_lea.vmem [#allocation5], %s285
        %p287 = pneg %p103
        %p288 = pneg %p100
        %s289 = sand.u32 %s21, 1
        %s290 = scalar_lea.sflag [#allocation6], %s289
        %s291 = sand.u32 %s116, 1
        %s292 = smul.addr %s291, 2
        %s293 = scalar_lea.vmem [#allocation7], %s292
        %p294 = pneg %p129
        %p295 = pneg %p126
        %p296 = pneg %p155
        %p297 = pneg %p152
        %s298 = smul.u32 2, %s25
        %p299 = scmp.lt.s32.totalorder %s298, 3
        %s300 = scalar_select %p299, %s298, 3
        %s301 = scalar_lea.vmem %s4, %s300
        %s302 = smul.u32 36, %s26
        %s303 = smul.u32 2, %s25
        %s304 = smul.u32 2, %s25
        %s305 = smul.u32 2, %s25
        %s306 = smul.u32 2, %s25
        %p307 = scmp.lt.s32.totalorder %s306, 3
        %s308 = scalar_select %p307, %s306, 3
        %s309 = scalar_lea.vmem %s4, %s308
        %s310 = smul.u32 2, %s25
        %p312 = scmp.eq.s32.totalorder %s26, 0
        // Predicated region
        $region49: #{frames_forward.2} parent=35 // pred_check
          %p313 = pneg %p312
        $region50: #{frames_forward.2} parent=35 // pred_check_branch
          %315 = sbr.rel (%p313) target = $region52
        $region51: #{frames_forward.2} parent=35 // pred_region
          %316 = vst [vmem:[#allocation2] sm:$0xf] 0.0
        $region52: #{frames_forward.2} parent=35 // pred_fallthru
          _
        %s317 = smul.u32 %s26, 1152
        %s318 = sshra.s32 %s317, 7
        %s319 = sand.u32 %s317, 127
        %s320 = scalar_lea.vmem %s0, %s318
        %v321 = vld [vmem:[%s320] sm:$0xff]
        %v322 = vld [vmem:[%s320 + $0x8] sm:$0x1]
        %v323 = vld [vmem:[%s250] sm:$0xff]
        %v324 = vld [vmem:[%s250 + $0x8] sm:$0xff]
        %v325 = vld [vmem:[%s250 + $0x10] sm:$0xff]
        %v326 = vld [vmem:[%s250 + $0x18] sm:$0xff]
        %v327 = vld [vmem:[%s250 + $0x20] sm:$0xff]
        %v328 = vld [vmem:[%s250 + $0x28] sm:$0xff]
        %v329 = vld [vmem:[%s250 + $0x30] sm:$0xff]
        %v330 = vld [vmem:[%s250 + $0x38] sm:$0xff]
        %v331 = vld [vmem:[%s250 + $0x40] sm:$0xff]
        %v332 = vld [vmem:[%s250 + $0x48] sm:$0xff]
        %v333 = vld [vmem:[%s250 + $0x50] sm:$0xff]
        %v334 = vld [vmem:[%s250 + $0x58] sm:$0xff]
        %v335 = vld [vmem:[%s250 + $0x60] sm:$0xff]
        %v336 = vld [vmem:[%s250 + $0x68] sm:$0xff]
        %v337 = vld [vmem:[%s250 + $0x70] sm:$0xff]
        %v338 = vld [vmem:[%s250 + $0x78] sm:$0xff]
        %v339 = vld [vmem:[%s250 + $0x80] sm:$0xff]
        %v340 = vld [vmem:[%s250 + $0x88] sm:$0xff]
        %v341 = vld [vmem:[%s250 + $0x90] sm:$0xff]
        %v342 = vld [vmem:[%s250 + $0x98] sm:$0xff]
        %v343 = vld [vmem:[%s250 + $0xa0] sm:$0xff]
        %v344 = vld [vmem:[%s250 + $0xa8] sm:$0xff]
        %v345 = vld [vmem:[%s250 + $0xb0] sm:$0xff]
        %v346 = vld [vmem:[%s250 + $0xb8] sm:$0xff]
        %v347 = vld [vmem:[%s250 + $0xc0] sm:$0xff]
        %v348 = vld [vmem:[%s250 + $0xc8] sm:$0xff]
        %v349 = vld [vmem:[%s250 + $0xd0] sm:$0xff]
        %v350 = vld [vmem:[%s250 + $0xd8] sm:$0xff]
        %v351 = vld [vmem:[%s250 + $0xe0] sm:$0xff]
        %v352 = vld [vmem:[%s250 + $0xe8] sm:$0xff]
        %v353 = vld [vmem:[%s250 + $0xf0] sm:$0xff]
        %v354 = vld [vmem:[%s250 + $0xf8] sm:$0xff]
        %v355 = vld [vmem:[%s250 + $0x100] sm:$0xff]
        %v356 = vld [vmem:[%s250 + $0x108] sm:$0xff]
        %v357 = vld [vmem:[%s250 + $0x110] sm:$0xff]
        %v358 = vld [vmem:[%s250 + $0x118] sm:$0xff]
        %v359 = vld [vmem:[%s250 + $0x120] sm:$0xff]
        %v360 = vld [vmem:[%s250 + $0x128] sm:$0xff]
        %v361 = vld [vmem:[%s250 + $0x130] sm:$0xff]
        %v362 = vld [vmem:[%s250 + $0x138] sm:$0xff]
        %v363 = vld [vmem:[%s250 + $0x140] sm:$0xff]
        %v364 = vld [vmem:[%s250 + $0x148] sm:$0xff]
        %v365 = vld [vmem:[%s250 + $0x150] sm:$0xff]
        %v366 = vld [vmem:[%s250 + $0x158] sm:$0xff]
        %v367 = vld [vmem:[%s250 + $0x160] sm:$0xff]
        %v368 = vld [vmem:[%s250 + $0x168] sm:$0xff]
        %v369 = vld [vmem:[%s250 + $0x170] sm:$0xff]
        %v370 = vld [vmem:[%s250 + $0x178] sm:$0xff]
        %v371 = vld [vmem:[%s250 + $0x180] sm:$0xff]
        %v372 = vld [vmem:[%s250 + $0x188] sm:$0xff]
        %v373 = vld [vmem:[%s250 + $0x190] sm:$0xff]
        %v374 = vld [vmem:[%s250 + $0x198] sm:$0xff]
        %v375 = vld [vmem:[%s250 + $0x1a0] sm:$0xff]
        %v376 = vld [vmem:[%s250 + $0x1a8] sm:$0xff]
        %v377 = vld [vmem:[%s250 + $0x1b0] sm:$0xff]
        %v378 = vld [vmem:[%s250 + $0x1b8] sm:$0xff]
        %v379 = vld [vmem:[%s250 + $0x1c0] sm:$0xff]
        %v380 = vld [vmem:[%s250 + $0x1c8] sm:$0xff]
        %v381 = vld [vmem:[%s250 + $0x1d0] sm:$0xff]
        %v382 = vld [vmem:[%s250 + $0x1d8] sm:$0xff]
        %v383 = vld [vmem:[%s250 + $0x1e0] sm:$0xff]
        %v384 = vld [vmem:[%s250 + $0x1e8] sm:$0xff]
        %v385 = vld [vmem:[%s250 + $0x1f0] sm:$0xff]
        %v386 = vld [vmem:[%s250 + $0x1f8] sm:$0xff]
        %v387 = vld [vmem:[%s250 + $0x200] sm:$0xff]
        %v388 = vld [vmem:[%s250 + $0x208] sm:$0xff]
        %v389 = vld [vmem:[%s250 + $0x210] sm:$0xff]
        %v390 = vld [vmem:[%s250 + $0x218] sm:$0xff]
        %v391 = vld [vmem:[%s250 + $0x220] sm:$0xff]
        %v392 = vld [vmem:[%s250 + $0x228] sm:$0xff]
        %v393 = vld [vmem:[%s250 + $0x230] sm:$0xff]
        %v394 = vld [vmem:[%s250 + $0x238] sm:$0xff]
        %v395 = vunpack.c.l.s8.bf16 %v323
        %v396 = vunpack.c.l.s8.bf16 %v324
        %v397 = vunpack.c.h.s8.bf16 %v323
        %v398 = vunpack.c.h.s8.bf16 %v324
        %v399 = vunpack.c.l.s8.bf16 %v325
        %v400 = vunpack.c.l.s8.bf16 %v326
        %v401 = vunpack.c.h.s8.bf16 %v325
        %v402 = vunpack.c.h.s8.bf16 %v326
        %v403 = vunpack.c.l.s8.bf16 %v327
        %v404 = vunpack.c.l.s8.bf16 %v328
        %v405 = vunpack.c.h.s8.bf16 %v327
        %v406 = vunpack.c.h.s8.bf16 %v328
        %v407 = vunpack.c.l.s8.bf16 %v329
        %v408 = vunpack.c.l.s8.bf16 %v330
        %v409 = vunpack.c.h.s8.bf16 %v329
        %v410 = vunpack.c.h.s8.bf16 %v330
        %v411 = vunpack.c.l.s8.bf16 %v331
        %v412 = vunpack.c.l.s8.bf16 %v332
        %v413 = vunpack.c.h.s8.bf16 %v331
        %v414 = vunpack.c.h.s8.bf16 %v332
        %v415 = vunpack.c.l.s8.bf16 %v333
        %v416 = vunpack.c.l.s8.bf16 %v334
        %v417 = vunpack.c.h.s8.bf16 %v333
        %v418 = vunpack.c.h.s8.bf16 %v334
        %v419 = vunpack.c.l.s8.bf16 %v335
        %v420 = vunpack.c.l.s8.bf16 %v336
        %v421 = vunpack.c.h.s8.bf16 %v335
        %v422 = vunpack.c.h.s8.bf16 %v336
        %v423 = vunpack.c.l.s8.bf16 %v337
        %v424 = vunpack.c.l.s8.bf16 %v338
        %v425 = vunpack.c.h.s8.bf16 %v337
        %v426 = vunpack.c.h.s8.bf16 %v338
        %v427 = vunpack.c.l.s8.bf16 %v339
        %v428 = vunpack.c.l.s8.bf16 %v340
        %v429 = vunpack.c.h.s8.bf16 %v339
        %v430 = vunpack.c.h.s8.bf16 %v340
        %v431 = vunpack.c.l.s8.bf16 %v341
        %v432 = vunpack.c.l.s8.bf16 %v342
        %v433 = vunpack.c.h.s8.bf16 %v341
        %v434 = vunpack.c.h.s8.bf16 %v342
        %v435 = vunpack.c.l.s8.bf16 %v343
        %v436 = vunpack.c.l.s8.bf16 %v344
        %v437 = vunpack.c.h.s8.bf16 %v343
        %v438 = vunpack.c.h.s8.bf16 %v344
        %v439 = vunpack.c.l.s8.bf16 %v345
        %v440 = vunpack.c.l.s8.bf16 %v346
        %v441 = vunpack.c.h.s8.bf16 %v345
        %v442 = vunpack.c.h.s8.bf16 %v346
        %v443 = vunpack.c.l.s8.bf16 %v347
        %v444 = vunpack.c.l.s8.bf16 %v348
        %v445 = vunpack.c.h.s8.bf16 %v347
        %v446 = vunpack.c.h.s8.bf16 %v348
        %v447 = vunpack.c.l.s8.bf16 %v349
        %v448 = vunpack.c.l.s8.bf16 %v350
        %v449 = vunpack.c.h.s8.bf16 %v349
        %v450 = vunpack.c.h.s8.bf16 %v350
        %v451 = vunpack.c.l.s8.bf16 %v351
        %v452 = vunpack.c.l.s8.bf16 %v352
        %v453 = vunpack.c.h.s8.bf16 %v351
        %v454 = vunpack.c.h.s8.bf16 %v352
        %v455 = vunpack.c.l.s8.bf16 %v353
        %v456 = vunpack.c.l.s8.bf16 %v354
        %v457 = vunpack.c.h.s8.bf16 %v353
        %v458 = vunpack.c.h.s8.bf16 %v354
        %v459 = vunpack.c.l.s8.bf16 %v355
        %v460 = vunpack.c.l.s8.bf16 %v356
        %v461 = vunpack.c.h.s8.bf16 %v355
        %v462 = vunpack.c.h.s8.bf16 %v356
        %v463 = vunpack.c.l.s8.bf16 %v357
        %v464 = vunpack.c.l.s8.bf16 %v358
        %v465 = vunpack.c.h.s8.bf16 %v357
        %v466 = vunpack.c.h.s8.bf16 %v358
        %v467 = vunpack.c.l.s8.bf16 %v359
        %v468 = vunpack.c.l.s8.bf16 %v360
        %v469 = vunpack.c.h.s8.bf16 %v359
        %v470 = vunpack.c.h.s8.bf16 %v360
        %v471 = vunpack.c.l.s8.bf16 %v361
        %v472 = vunpack.c.l.s8.bf16 %v362
        %v473 = vunpack.c.h.s8.bf16 %v361
        %v474 = vunpack.c.h.s8.bf16 %v362
        %v475 = vunpack.c.l.s8.bf16 %v363
        %v476 = vunpack.c.l.s8.bf16 %v364
        %v477 = vunpack.c.h.s8.bf16 %v363
        %v478 = vunpack.c.h.s8.bf16 %v364
        %v479 = vunpack.c.l.s8.bf16 %v365
        %v480 = vunpack.c.l.s8.bf16 %v366
        %v481 = vunpack.c.h.s8.bf16 %v365
        %v482 = vunpack.c.h.s8.bf16 %v366
        %v483 = vunpack.c.l.s8.bf16 %v367
        %v484 = vunpack.c.l.s8.bf16 %v368
        %v485 = vunpack.c.h.s8.bf16 %v367
        %v486 = vunpack.c.h.s8.bf16 %v368
        %v487 = vunpack.c.l.s8.bf16 %v369
        %v488 = vunpack.c.l.s8.bf16 %v370
        %v489 = vunpack.c.h.s8.bf16 %v369
        %v490 = vunpack.c.h.s8.bf16 %v370
        %v491 = vunpack.c.l.s8.bf16 %v371
        %v492 = vunpack.c.l.s8.bf16 %v372
        %v493 = vunpack.c.h.s8.bf16 %v371
        %v494 = vunpack.c.h.s8.bf16 %v372
        %v495 = vunpack.c.l.s8.bf16 %v373
        %v496 = vunpack.c.l.s8.bf16 %v374
        %v497 = vunpack.c.h.s8.bf16 %v373
        %v498 = vunpack.c.h.s8.bf16 %v374
        %v499 = vunpack.c.l.s8.bf16 %v375
        %v500 = vunpack.c.l.s8.bf16 %v376
        %v501 = vunpack.c.h.s8.bf16 %v375
        %v502 = vunpack.c.h.s8.bf16 %v376
        %v503 = vunpack.c.l.s8.bf16 %v377
        %v504 = vunpack.c.l.s8.bf16 %v378
        %v505 = vunpack.c.h.s8.bf16 %v377
        %v506 = vunpack.c.h.s8.bf16 %v378
        %v507 = vunpack.c.l.s8.bf16 %v379
        %v508 = vunpack.c.l.s8.bf16 %v380
        %v509 = vunpack.c.h.s8.bf16 %v379
        %v510 = vunpack.c.h.s8.bf16 %v380
        %v511 = vunpack.c.l.s8.bf16 %v381
        %v512 = vunpack.c.l.s8.bf16 %v382
        %v513 = vunpack.c.h.s8.bf16 %v381
        %v514 = vunpack.c.h.s8.bf16 %v382
        %v515 = vunpack.c.l.s8.bf16 %v383
        %v516 = vunpack.c.l.s8.bf16 %v384
        %v517 = vunpack.c.h.s8.bf16 %v383
        %v518 = vunpack.c.h.s8.bf16 %v384
        %v519 = vunpack.c.l.s8.bf16 %v385
        %v520 = vunpack.c.l.s8.bf16 %v386
        %v521 = vunpack.c.h.s8.bf16 %v385
        %v522 = vunpack.c.h.s8.bf16 %v386
        %v523 = vunpack.c.l.s8.bf16 %v387
        %v524 = vunpack.c.l.s8.bf16 %v388
        %v525 = vunpack.c.h.s8.bf16 %v387
        %v526 = vunpack.c.h.s8.bf16 %v388
        %v527 = vunpack.c.l.s8.bf16 %v389
        %v528 = vunpack.c.l.s8.bf16 %v390
        %v529 = vunpack.c.h.s8.bf16 %v389
        %v530 = vunpack.c.h.s8.bf16 %v390
        %v531 = vunpack.c.l.s8.bf16 %v391
        %v532 = vunpack.c.l.s8.bf16 %v392
        %v533 = vunpack.c.h.s8.bf16 %v391
        %v534 = vunpack.c.h.s8.bf16 %v392
        %v535 = vunpack.c.l.s8.bf16 %v393
        %v536 = vunpack.c.l.s8.bf16 %v394
        %v537 = vunpack.c.h.s8.bf16 %v393
        %v538 = vunpack.c.h.s8.bf16 %v394
        %v539 = vld [vmem:[#allocation2] sm:$0xf]
        %v542 = vcombine.high %v321, %v321
        %v544 = vunpack.c.l.s4 1966171168
        %v545 = vunpack.c.0.s8 %v544
        %v546 = vlaneseq
        %v547 = vshrl.u32 %v546, 7
        %v548 = vsub.s32 %v545, %v547
        %v549 = vrot.slane %v321, %v548
        %v551 = vunpack.c.l.s4 1966171168
        %v552 = vunpack.c.0.s8 %v551
        %v553 = vlaneseq
        %v554 = vshrl.u32 %v553, 7
        %v555 = vsub.s32 %v552, %v554
        %v556 = vrot.slane %v542, %v555
        %v557 = vcombine.high %v549, %v549
        %v558 = vcombine.high %v556, %v556
        %v560 = vunpack.c.l.s4 1966171168
        %v561 = vunpack.c.0.s8 %v560
        %v562 = vlaneseq
        %v563 = vshrl.u32 %v562, 7
        %v564 = vsub.s32 %v561, %v563
        %v565 = vrot.slane %v549, %v564
        %v567 = vunpack.c.l.s4 1966171168
        %v568 = vunpack.c.0.s8 %v567
        %v569 = vlaneseq
        %v570 = vshrl.u32 %v569, 7
        %v571 = vsub.s32 %v568, %v570
        %v572 = vrot.slane %v556, %v571
        %v574 = vunpack.c.l.s4 1966171168
        %v575 = vunpack.c.0.s8 %v574
        %v576 = vlaneseq
        %v577 = vshrl.u32 %v576, 7
        %v578 = vsub.s32 %v575, %v577
        %v579 = vrot.slane %v557, %v578
        %v581 = vunpack.c.l.s4 1966171168
        %v582 = vunpack.c.0.s8 %v581
        %v583 = vlaneseq
        %v584 = vshrl.u32 %v583, 7
        %v585 = vsub.s32 %v582, %v584
        %v586 = vrot.slane %v558, %v585
        %v587 = vcombine.high %v565, %v565
        %v588 = vcombine.high %v572, %v572
        %v589 = vcombine.high %v579, %v579
        %v590 = vcombine.high %v586, %v586
        %v592 = vunpack.c.l.s4 1966171168
        %v593 = vunpack.c.0.s8 %v592
        %v594 = vlaneseq
        %v595 = vshrl.u32 %v594, 7
        %v596 = vsub.s32 %v593, %v595
        %v597 = vrot.slane %v322, %v596
        %v599 = vunpack.c.l.s4 1966171168
        %v600 = vunpack.c.0.s8 %v599
        %v601 = vlaneseq
        %v602 = vshrl.u32 %v601, 7
        %v603 = vsub.s32 %v600, %v602
        %v604 = vrot.slane %v597, %v603
        %614 = vmatprep.subr.bf16.mxu0 %v410
        %615 = vmatpush1.bf16.msra.mxu0 %v409
        %616 = vmatprep.subr.bf16.mxu0 %v408
        %617 = vmatpush1.bf16.msra.mxu0 %v407
        %618 = vmatprep.subr.bf16.mxu0 %v406
        %619 = vmatpush1.bf16.msra.mxu0 %v405
        %620 = vmatprep.subr.bf16.mxu0 %v404
        %621 = vmatpush1.bf16.msra.mxu0 %v403
        %622 = vmatprep.subr.bf16.mxu0 %v402
        %623 = vmatpush1.bf16.msra.mxu0 %v401
        %624 = vmatprep.subr.bf16.mxu0 %v400
        %625 = vmatpush1.bf16.msra.mxu0 %v399
        %626 = vmatprep.subr.bf16.mxu0 %v398
        %627 = vmatpush1.bf16.msra.mxu0 %v397
        %628 = vmatprep.subr.bf16.mxu0 %v396
        %629 = vmatpush1.bf16.msra.mxu0 %v395
        %630 = vmatprep.subr.bf16.mxu0 %v426
        %631 = vmatpush2.bf16.msra.mxu0 %v425
        %632 = vmatprep.subr.bf16.mxu0 %v424
        %633 = vmatpush2.bf16.msra.mxu0 %v423
        %634 = vmatprep.subr.bf16.mxu0 %v422
        %635 = vmatpush2.bf16.msra.mxu0 %v421
        %636 = vmatprep.subr.bf16.mxu0 %v420
        %637 = vmatpush2.bf16.msra.mxu0 %v419
        %638 = vmatprep.subr.bf16.mxu0 %v418
        %639 = vmatpush2.bf16.msra.mxu0 %v417
        %640 = vmatprep.subr.bf16.mxu0 %v416
        %641 = vmatpush2.bf16.msra.mxu0 %v415
        %642 = vmatprep.subr.bf16.mxu0 %v414
        %643 = vmatpush2.bf16.msra.mxu0 %v413
        %644 = vmatprep.subr.bf16.mxu0 %v412
        %645 = vmatpush2.bf16.msra.mxu0 %v411
        %646 = vmatprep.mubr.bf16.mxu0 %v579
        %647 = vmatmul.mubr.bf16.gmra.mxu0 %v565
        %v648 = vpop.f32.mrf.mxu0
        %v649 = vadd.f32 0.0, %v648
        %v650 = vpop.f32.mrf.mxu0
        %v651 = vadd.f32 0.0, %v650
        %v652 = vpop.f32.mrf.mxu0
        %v653 = vpop.f32.mrf.mxu0
        %654 = vdwg.mxu0
        %655 = vmatprep.subr.bf16.mxu0 %v442
        %656 = vmatpush1.bf16.msra.mxu0 %v441
        %657 = vmatprep.subr.bf16.mxu0 %v440
        %658 = vmatpush1.bf16.msra.mxu0 %v439
        %659 = vmatprep.subr.bf16.mxu0 %v438
        %660 = vmatpush1.bf16.msra.mxu0 %v437
        %661 = vmatprep.subr.bf16.mxu0 %v436
        %662 = vmatpush1.bf16.msra.mxu0 %v435
        %663 = vmatprep.subr.bf16.mxu0 %v434
        %664 = vmatpush1.bf16.msra.mxu0 %v433
        %665 = vmatprep.subr.bf16.mxu0 %v432
        %666 = vmatpush1.bf16.msra.mxu0 %v431
        %667 = vmatprep.subr.bf16.mxu0 %v430
        %668 = vmatpush1.bf16.msra.mxu0 %v429
        %669 = vmatprep.subr.bf16.mxu0 %v428
        %670 = vmatpush1.bf16.msra.mxu0 %v427
        %671 = vmatprep.subr.bf16.mxu0 %v458
        %672 = vmatpush2.bf16.msra.mxu0 %v457
        %673 = vmatprep.subr.bf16.mxu0 %v456
        %674 = vmatpush2.bf16.msra.mxu0 %v455
        %675 = vmatprep.subr.bf16.mxu0 %v454
        %676 = vmatpush2.bf16.msra.mxu0 %v453
        %677 = vmatprep.subr.bf16.mxu0 %v452
        %678 = vmatpush2.bf16.msra.mxu0 %v451
        %679 = vmatprep.subr.bf16.mxu0 %v450
        %680 = vmatpush2.bf16.msra.mxu0 %v449
        %681 = vmatprep.subr.bf16.mxu0 %v448
        %682 = vmatpush2.bf16.msra.mxu0 %v447
        %683 = vmatprep.subr.bf16.mxu0 %v446
        %684 = vmatpush2.bf16.msra.mxu0 %v445
        %685 = vmatprep.subr.bf16.mxu0 %v444
        %686 = vmatpush2.bf16.msra.mxu0 %v443
        %687 = vmatprep.mubr.bf16.mxu0 %v589
        %688 = vmatmul.mubr.bf16.gmra.mxu0 %v587
        %v689 = vpop.f32.mrf.mxu0
        %v690 = vadd.f32 %v649, %v689
        %v691 = vpop.f32.mrf.mxu0
        %v692 = vadd.f32 %v651, %v691
        %v693 = vpop.f32.mrf.mxu0
        %v694 = vpop.f32.mrf.mxu0
        %695 = vdwg.mxu0
        %696 = vmatprep.subr.bf16.mxu0 %v474
        %697 = vmatpush1.bf16.msra.mxu0 %v473
        %698 = vmatprep.subr.bf16.mxu0 %v472
        %699 = vmatpush1.bf16.msra.mxu0 %v471
        %700 = vmatprep.subr.bf16.mxu0 %v470
        %701 = vmatpush1.bf16.msra.mxu0 %v469
        %702 = vmatprep.subr.bf16.mxu0 %v468
        %703 = vmatpush1.bf16.msra.mxu0 %v467
        %704 = vmatprep.subr.bf16.mxu0 %v466
        %705 = vmatpush1.bf16.msra.mxu0 %v465
        %706 = vmatprep.subr.bf16.mxu0 %v464
        %707 = vmatpush1.bf16.msra.mxu0 %v463
        %708 = vmatprep.subr.bf16.mxu0 %v462
        %709 = vmatpush1.bf16.msra.mxu0 %v461
        %710 = vmatprep.subr.bf16.mxu0 %v460
        %711 = vmatpush1.bf16.msra.mxu0 %v459
        %712 = vmatprep.subr.bf16.mxu0 %v490
        %713 = vmatpush2.bf16.msra.mxu0 %v489
        %714 = vmatprep.subr.bf16.mxu0 %v488
        %715 = vmatpush2.bf16.msra.mxu0 %v487
        %716 = vmatprep.subr.bf16.mxu0 %v486
        %717 = vmatpush2.bf16.msra.mxu0 %v485
        %718 = vmatprep.subr.bf16.mxu0 %v484
        %719 = vmatpush2.bf16.msra.mxu0 %v483
        %720 = vmatprep.subr.bf16.mxu0 %v482
        %721 = vmatpush2.bf16.msra.mxu0 %v481
        %722 = vmatprep.subr.bf16.mxu0 %v480
        %723 = vmatpush2.bf16.msra.mxu0 %v479
        %724 = vmatprep.subr.bf16.mxu0 %v478
        %725 = vmatpush2.bf16.msra.mxu0 %v477
        %726 = vmatprep.subr.bf16.mxu0 %v476
        %727 = vmatpush2.bf16.msra.mxu0 %v475
        %728 = vmatprep.mubr.bf16.mxu0 %v586
        %729 = vmatmul.mubr.bf16.gmra.mxu0 %v572
        %v730 = vpop.f32.mrf.mxu0
        %v731 = vadd.f32 %v690, %v730
        %v732 = vpop.f32.mrf.mxu0
        %v733 = vadd.f32 %v692, %v732
        %v734 = vpop.f32.mrf.mxu0
        %v735 = vpop.f32.mrf.mxu0
        %736 = vdwg.mxu0
        %737 = vmatprep.subr.bf16.mxu0 %v506
        %738 = vmatpush1.bf16.msra.mxu0 %v505
        %739 = vmatprep.subr.bf16.mxu0 %v504
        %740 = vmatpush1.bf16.msra.mxu0 %v503
        %741 = vmatprep.subr.bf16.mxu0 %v502
        %742 = vmatpush1.bf16.msra.mxu0 %v501
        %743 = vmatprep.subr.bf16.mxu0 %v500
        %744 = vmatpush1.bf16.msra.mxu0 %v499
        %745 = vmatprep.subr.bf16.mxu0 %v498
        %746 = vmatpush1.bf16.msra.mxu0 %v497
        %747 = vmatprep.subr.bf16.mxu0 %v496
        %748 = vmatpush1.bf16.msra.mxu0 %v495
        %749 = vmatprep.subr.bf16.mxu0 %v494
        %750 = vmatpush1.bf16.msra.mxu0 %v493
        %751 = vmatprep.subr.bf16.mxu0 %v492
        %752 = vmatpush1.bf16.msra.mxu0 %v491
        %753 = vmatprep.subr.bf16.mxu0 %v522
        %754 = vmatpush2.bf16.msra.mxu0 %v521
        %755 = vmatprep.subr.bf16.mxu0 %v520
        %756 = vmatpush2.bf16.msra.mxu0 %v519
        %757 = vmatprep.subr.bf16.mxu0 %v518
        %758 = vmatpush2.bf16.msra.mxu0 %v517
        %759 = vmatprep.subr.bf16.mxu0 %v516
        %760 = vmatpush2.bf16.msra.mxu0 %v515
        %761 = vmatprep.subr.bf16.mxu0 %v514
        %762 = vmatpush2.bf16.msra.mxu0 %v513
        %763 = vmatprep.subr.bf16.mxu0 %v512
        %764 = vmatpush2.bf16.msra.mxu0 %v511
        %765 = vmatprep.subr.bf16.mxu0 %v510
        %766 = vmatpush2.bf16.msra.mxu0 %v509
        %767 = vmatprep.subr.bf16.mxu0 %v508
        %768 = vmatpush2.bf16.msra.mxu0 %v507
        %769 = vmatprep.mubr.bf16.mxu0 %v590
        %770 = vmatmul.mubr.bf16.gmra.mxu0 %v588
        %v771 = vpop.f32.mrf.mxu0
        %v772 = vadd.f32 %v731, %v771
        %v773 = vpop.f32.mrf.mxu0
        %v774 = vadd.f32 %v733, %v773
        %v775 = vpop.f32.mrf.mxu0
        %v776 = vpop.f32.mrf.mxu0
        %777 = vdwg.mxu0
        %778 = vmatprep.subr.bf16.mxu0 %v538
        %779 = vmatpush1.bf16.msra.mxu0 %v537
        %780 = vmatprep.subr.bf16.mxu0 %v536
        %781 = vmatpush1.bf16.msra.mxu0 %v535
        %782 = vmatprep.subr.bf16.mxu0 %v534
        %783 = vmatpush1.bf16.msra.mxu0 %v533
        %784 = vmatprep.subr.bf16.mxu0 %v532
        %785 = vmatpush1.bf16.msra.mxu0 %v531
        %786 = vmatprep.subr.bf16.mxu0 %v530
        %787 = vmatpush1.bf16.msra.mxu0 %v529
        %788 = vmatprep.subr.bf16.mxu0 %v528
        %789 = vmatpush1.bf16.msra.mxu0 %v527
        %790 = vmatprep.subr.bf16.mxu0 %v526
        %791 = vmatpush1.bf16.msra.mxu0 %v525
        %792 = vmatprep.subr.bf16.mxu0 %v524
        %793 = vmatpush1.bf16.msra.mxu0 %v523
        %794 = vmatprep.subr.bf16.mxu0 0
        %795 = vmatpush2.bf16.msra.mxu0 0
        %796 = vmatprep.subr.bf16.mxu0 0
        %797 = vmatpush2.bf16.msra.mxu0 0
        %798 = vmatprep.subr.bf16.mxu0 0
        %799 = vmatpush2.bf16.msra.mxu0 0
        %800 = vmatprep.subr.bf16.mxu0 0
        %801 = vmatpush2.bf16.msra.mxu0 0
        %802 = vmatprep.subr.bf16.mxu0 0
        %803 = vmatpush2.bf16.msra.mxu0 0
        %804 = vmatprep.subr.bf16.mxu0 0
        %805 = vmatpush2.bf16.msra.mxu0 0
        %806 = vmatprep.subr.bf16.mxu0 0
        %807 = vmatpush2.bf16.msra.mxu0 0
        %808 = vmatprep.subr.bf16.mxu0 0
        %809 = vmatpush2.bf16.msra.mxu0 0
        %810 = vmatprep.mubr.bf16.mxu0 0
        %811 = vmatmul.mubr.bf16.gmra.mxu0 %v604
        %v812 = vpop.f32.mrf.mxu0
        %v813 = vadd.f32 %v772, %v812
        %v814 = vpop.f32.mrf.mxu0
        %v815 = vadd.f32 %v774, %v814
        %v816 = vpop.f32.mrf.mxu0
        %v817 = vpop.f32.mrf.mxu0
        %818 = vdwg.mxu0
        %v821 = vcombine.low %v813, %v815
        %v823 = vunpack.c.l.s4 1983009808
        %v824 = vunpack.c.0.s8 %v823
        %v825 = vlaneseq
        %v826 = vshrl.u32 %v825, 7
        %v827 = vsub.s32 %v824, %v826
        %v828 = vrot.slane %v821, %v827
        %v830 = vadd.f32 %v539, %v828
        %831 = vst [vmem:[#allocation2] sm:$0xf] %v830
        %p832 = scmp.eq.s32.totalorder %s26, 1
        // Predicated region
        $region53: #{frames_forward.2} parent=35 // pred_check
          %p833 = pneg %p832
        $region54: #{frames_forward.2} parent=35 // pred_check_branch
          %835 = sbr.rel (%p833) target = $region56
        $region55: #{frames_forward.2} parent=35 // pred_region
          %v836 = vld [vmem:[#allocation2] sm:$0xf]
          %v837 = vld [vmem:[%s259] sm:$0x3]
          %v839 = vlaneseq
          %v840 = vshrl.u32 %v839, 7
          %v841 = vsub.s32 0, %v840
          %v842 = vrot.slane %v837, %v841
          %v843 = vlaneseq
          %v844 = vshrl.u32 %v843, 7
          %v845 = vsub.s32 1, %v844
          %v846 = vrot.slane %v837, %v845
          %v847 = vcombine.low %v842, %v846
          %v849 = vunpack.c.l.s4 1983009808
          %v850 = vunpack.c.0.s8 %v849
          %v851 = vlaneseq
          %v852 = vshrl.u32 %v851, 7
          %v853 = vsub.s32 %v850, %v852
          %v854 = vrot.slane %v847, %v853
          %v856 = vmul.f32 %v836, %v854
          %v857 = vld [vmem:[%s268] sm:$0x3]
          %v859 = vlaneseq
          %v860 = vshrl.u32 %v859, 7
          %v861 = vsub.s32 0, %v860
          %v862 = vrot.slane %v857, %v861
          %v863 = vlaneseq
          %v864 = vshrl.u32 %v863, 7
          %v865 = vsub.s32 1, %v864
          %v866 = vrot.slane %v857, %v865
          %v867 = vcombine.low %v862, %v866
          %v869 = vunpack.c.l.s4 1983009808
          %v870 = vunpack.c.0.s8 %v869
          %v871 = vlaneseq
          %v872 = vshrl.u32 %v871, 7
          %v873 = vsub.s32 %v870, %v872
          %v874 = vrot.slane %v867, %v873
          %v876 = vadd.f32 %v856, %v874
          %v877 = vmax.f32 %v876, 0.0
          %v880 = vunpack.c.l.s4 1983009808
          %v881 = vunpack.c.0.s8 %v880
          %v882 = vlaneseq
          %v883 = vshrl.u32 %v882, 7
          %v884 = vsub.s32 %v881, %v883
          %v885 = vrot.slane %v877, %v884
          %v886 = vcombine.high %v885, %v885
          %v889 = vpack.c.bf16 %v885, %v885
          %v890 = vpack.c.bf16 %v886, %v886
          %v893 = vcombine.low %v889, %v890
          %v895 = vunpack.c.l.s4 1966171168
          %v896 = vunpack.c.0.s8 %v895
          %v897 = vlaneseq
          %v898 = vshrl.u32 %v897, 7
          %v899 = vsub.s32 %v896, %v898
          %v900 = vrot.slane %v893, %v899
          %v902 = vunpack.c.l.s4 1966171168
          %v903 = vunpack.c.0.s8 %v902
          %v904 = vlaneseq
          %v905 = vshrl.u32 %v904, 7
          %v906 = vsub.s32 %v903, %v905
          %v907 = vrot.slane %v900, %v906
          %909 = vst [vmem:[%s309] sm:$0x3] %v907
        $region56: #{frames_forward.2} parent=35 // pred_fallthru
          _
        %s910 = smul.u32 2, %s25
        %p911 = scmp.lt.s32.totalorder %s910, 3
        %s912 = scalar_select %p911, %s910, 3
        %s913 = scalar_lea.vmem %s4, %s912
        // Predicated region
        $region57: #{frames_forward.2} parent=35 // pred_check
          %p914 = pneg %p152
        $region58: #{frames_forward.2} parent=35 // pred_check_branch
          %916 = sbr.rel (%p914) target = $region60
        $region59: #{frames_forward.2} parent=35 // pred_region
          %s917 = smul.u32 2, %s25
        $region60: #{frames_forward.2} parent=35 // pred_fallthru
          _
      $region36: #{frames_forward.2} parent=5 // pred_fallthru
        _
      %p918 = scmp.le.s32.totalorder 2, %s16
      // Predicated region
      $region61: #{frames_forward.2} parent=5 // pred_check
        %p919 = pneg %p918
      $region62: #{frames_forward.2} parent=5 // pred_check_branch
        %921 = sbr.rel (%p919) target = $region64
      $region63: #{frames_forward.2} parent=5 // pred_region
        %s922 = ssub.s32 %s16, 2
        // Predicated region
        $region65: #{frames_forward.2} parent=63 // pred_check
          %p923 = pneg %p158
        $region66: #{frames_forward.2} parent=63 // pred_check_branch
          %925 = sbr.rel (%p923) target = $region68
        $region67: #{frames_forward.2} parent=63 // pred_region
          %s926 = smul.u32 2, %s27
          %p927 = scmp.lt.s32.totalorder %s926, 3
          %s928 = scalar_select %p927, %s926, 3
          %s929 = scalar_lea.vmem %s4, %s928
        $region68: #{frames_forward.2} parent=63 // pred_fallthru
          _
      $region64: #{frames_forward.2} parent=5 // pred_fallthru
        _
    $region6: #{frames_forward.2} parent=1 // loop_footer
      %s20 = sadd.s32 1, %s16
    $region7: #{frames_forward.2} parent=1 // loop_footer_branch
      %15 = sbr.rel target = $region3
    $region8: #{frames_forward.2} parent=1 // loop_exit
      _
    %930 = vsyncpa [#allocation4], 1
    %s931 = scalar_lea.sflag [#allocation4], 1
    %932 = vsyncpa %s931, 1
    %933 = vsyncpa [#allocation6], 1
    %s934 = scalar_lea.sflag [#allocation6], 1
    %935 = vsyncpa %s934, 1

</llo_original>
